<compile_context>
chip_gen: v5e
topology: v5e:2x2
jax: 0.10.0
libtpu: 0.0.40
codegen_flags: <defaults>
</compile_context>

<pallas_src>
import numpy as np
import jax
import jax.numpy as jnp
from jax.experimental import pallas as pl
from jax.experimental.pallas import tpu as pltpu


NUM_CLASS = 1024
H1 = 1024
H2 = 512
NUM_OUT = int(np.log2(NUM_CLASS - 1)) + 1  # = 10
OUT_PAD = 128                              # lane-dense fc3 output width
TN = 256                                   # H1 tile (grid = H1 // TN = 4 steps)


def mlp_kernel(x_ref, w1_ref, b1_ref, w2_ref, b2_ref, w3_ref, b3_ref,
               o_ref, acc2_ref):
    j = pl.program_id(0)

    @pl.when(j == 0)
    def _():
        acc2_ref[...] = jnp.zeros_like(acc2_ref)

    # fc1, N-tile j: (batch, TN) slice of hidden-1, then ReLU (f32).
    h1_j = jnp.dot(x_ref[...], w1_ref[...], preferred_element_type=jnp.float32)
    h1_j = jnp.maximum(h1_j + b1_ref[...], 0.0)

    # fc2 partial sum: this H1 tile is one K-chunk of fc2's contraction.
    acc2_ref[...] += jnp.dot(h1_j.astype(jnp.bfloat16), w2_ref[...],
                             preferred_element_type=jnp.float32)

    @pl.when(j == pl.num_programs(0) - 1)
    def _():
        h2 = jnp.maximum(acc2_ref[...] + b2_ref[...], 0.0)
        h3 = jnp.dot(h2.astype(jnp.bfloat16), w3_ref[...],
                     preferred_element_type=jnp.float32) + b3_ref[...]
        o_ref[...] = jax.nn.sigmoid(h3)


def net_forward(x, w1, b1, w2, b2, w3, b3):
    """x: [batch, NUM_CLASS] f32; w*: bf16 [in, out]; b*: f32 [1, out]."""
    batch = x.shape[0]
    x_bf = x.astype(jnp.bfloat16)

    # Pad fc3 weight/bias to 128 output lanes (zeros => sigmoid(0)=0.5 in the
    # padded columns, which are sliced off below).
    w3p = jnp.zeros((H2, OUT_PAD), w3.dtype).at[:, :NUM_OUT].set(w3)
    b3p = jnp.zeros((1, OUT_PAD), b3.dtype).at[:, :NUM_OUT].set(b3)

    out = pl.pallas_call(
        mlp_kernel,
        out_shape=jax.ShapeDtypeStruct((batch, OUT_PAD), jnp.float32),
        grid_spec=pltpu.PrefetchScalarGridSpec(
            num_scalar_prefetch=0,
            grid=(H1 // TN,),
            in_specs=[
                pl.BlockSpec((batch, NUM_CLASS), lambda j: (0, 0)),   # x (loaded once)
                pl.BlockSpec((NUM_CLASS, TN),   lambda j: (0, j)),    # w1 N-tile
                pl.BlockSpec((1, TN),           lambda j: (0, j)),    # b1 tile
                pl.BlockSpec((TN, H2),          lambda j: (j, 0)),    # w2 K-tile
                pl.BlockSpec((1, H2),           lambda j: (0, 0)),    # b2 (once)
                pl.BlockSpec((H2, OUT_PAD),     lambda j: (0, 0)),    # w3 (once)
                pl.BlockSpec((1, OUT_PAD),      lambda j: (0, 0)),    # b3 (once)
            ],
            out_specs=pl.BlockSpec((batch, OUT_PAD), lambda j: (0, 0)),
            scratch_shapes=[pltpu.VMEM((batch, H2), jnp.float32)],
        ),
        compiler_params=pltpu.CompilerParams(
            dimension_semantics=("arbitrary",),   # reduction-style grid axis
            vmem_limit_bytes=32 << 20,            # fits all gens incl. v7x (64 MiB VMEM)
        ),
    )(x_bf, w1, b1, w2, b2, w3p, b3p)
    return out[:, :NUM_OUT]


def init_params(key):
    """Deterministic init mirroring nn.Linear's U(-1/sqrt(fan_in), 1/sqrt(fan_in)).
    Weights are returned already transposed to [in, out] and cast to bf16."""
    ks = jax.random.split(key, 6)

    def lin(kw, kb, fan_in, fan_out):
        bound = 1.0 / np.sqrt(fan_in)
        w = jax.random.uniform(kw, (fan_in, fan_out), jnp.float32, -bound, bound)
        b = jax.random.uniform(kb, (1, fan_out), jnp.float32, -bound, bound)
        return w.astype(jnp.bfloat16), b

    w1, b1 = lin(ks[0], ks[1], NUM_CLASS, H1)
    w2, b2 = lin(ks[2], ks[3], H1, H2)
    w3, b3 = lin(ks[4], ks[5], H2, NUM_OUT)
    return w1, b1, w2, b2, w3, b3


def reference_forward(x, w1, b1, w2, b2, w3, b3):
    """Pure-JAX reference with the same mixed precision as the kernel."""
    h1 = jnp.maximum(
        jnp.dot(x.astype(jnp.bfloat16), w1, preferred_element_type=jnp.float32) + b1, 0.0)
    h2 = jnp.maximum(
        jnp.dot(h1.astype(jnp.bfloat16), w2, preferred_element_type=jnp.float32) + b2, 0.0)
    h3 = jnp.dot(h2.astype(jnp.bfloat16), w3, preferred_element_type=jnp.float32) + b3
    return jax.nn.sigmoid(h3)


if __name__ == "__main__":
    key = jax.random.PRNGKey(0)
    k_x, k_p = jax.random.split(key)

    batch = 8
    # One-hot input: [batch, num_class], matching nn.Linear(num_class, ...)
    idx = jax.random.randint(k_x, (batch,), 0, NUM_CLASS)
    x = jax.nn.one_hot(idx, NUM_CLASS, dtype=jnp.float32)

    params = init_params(k_p)

    out = net_forward(x, *params)
    out = jax.block_until_ready(out)

    ref = reference_forward(x, *params)
    assert out.shape == (batch, NUM_OUT)
    assert jnp.allclose(out, ref, atol=2e-3, rtol=2e-3)

    print("KERNEL_OK")
</pallas_src>

<mosaic_0001>
module attributes {stable_mosaic.version = 11 : i64} {
  func.func @mlp_kernel(%arg0: i32, %arg1: memref<8x1024xbf16, #tpu.memory_space<vmem>>, %arg2: memref<1024x256xbf16, #tpu.memory_space<vmem>>, %arg3: memref<1x256xf32, #tpu.memory_space<vmem>>, %arg4: memref<256x512xbf16, #tpu.memory_space<vmem>>, %arg5: memref<1x512xf32, #tpu.memory_space<vmem>>, %arg6: memref<512x128xbf16, #tpu.memory_space<vmem>>, %arg7: memref<1x128xf32, #tpu.memory_space<vmem>>, %arg8: memref<8x128xf32, #tpu.memory_space<vmem>>, %arg9: memref<8x512xf32, #tpu.memory_space<vmem>>) attributes {dimension_semantics = [#tpu.dimension_semantics<arbitrary>], iteration_bounds = array<i64: 4>, scalar_prefetch = 0 : i64, scratch_operands = 1 : i64, tpu.core_type = #tpu.core_type<tc>, window_params = [{pipeline_mode = #tpu.pipeline_mode<synchronous>, transform_indices = @transform_0, window_bounds = array<i64: 8, 1024>}, {transform_indices = @transform_1, window_bounds = array<i64: 1024, 256>}, {transform_indices = @transform_2, window_bounds = array<i64: 1, 256>}, {transform_indices = @transform_3, window_bounds = array<i64: 256, 512>}, {pipeline_mode = #tpu.pipeline_mode<synchronous>, transform_indices = @transform_4, window_bounds = array<i64: 1, 512>}, {pipeline_mode = #tpu.pipeline_mode<synchronous>, transform_indices = @transform_5, window_bounds = array<i64: 512, 128>}, {pipeline_mode = #tpu.pipeline_mode<synchronous>, transform_indices = @transform_6, window_bounds = array<i64: 1, 128>}, {pipeline_mode = #tpu.pipeline_mode<synchronous>, transform_indices = @transform_7, window_bounds = array<i64: 8, 128>}]} {
    %c0_i32 = arith.constant 0 : i32
    %0 = arith.cmpi eq, %arg0, %c0_i32 : i32
    %1 = arith.extui %0 : i1 to i32
    %c0_i32_0 = arith.constant 0 : i32
    %2 = arith.cmpi ne, %1, %c0_i32_0 : i32
    scf.if %2 {
      %cst_15 = arith.constant 0.000000e+00 : f32
      %20 = vector.broadcast %cst_15 : f32 to vector<8x512xf32>
      %c0_16 = arith.constant 0 : index
      %c0_17 = arith.constant 0 : index
      %21 = vector.load %arg9[%c0_16, %c0_17] : memref<8x512xf32, #tpu.memory_space<vmem>>, vector<8x512xf32>
      tpu.vector_store %arg9[%c0_16, %c0_17], %20 {strides = array<i32>} : memref<8x512xf32, #tpu.memory_space<vmem>>, vector<8x512xf32>,
    } else {
    }
    %c0 = arith.constant 0 : index
    %c0_1 = arith.constant 0 : index
    %3 = vector.load %arg1[%c0, %c0_1] : memref<8x1024xbf16, #tpu.memory_space<vmem>>, vector<8x1024xbf16>
    %c0_2 = arith.constant 0 : index
    %c0_3 = arith.constant 0 : index
    %4 = vector.load %arg2[%c0_2, %c0_3] : memref<1024x256xbf16, #tpu.memory_space<vmem>>, vector<1024x256xbf16>
    %cst = arith.constant dense<0.000000e+00> : vector<8x256xf32>
    %5 = tpu.matmul %3, %4, %cst {dimension_numbers = #tpu.dot_dimension_numbers<[1], [0], [0], [1], [0, 0, 1, 1], [], []>} : vector<8x1024xbf16>, vector<1024x256xbf16>, vector<8x256xf32> -> vector<8x256xf32>
    %c0_4 = arith.constant 0 : index
    %c0_5 = arith.constant 0 : index
    %6 = vector.load %arg3[%c0_4, %c0_5] : memref<1x256xf32, #tpu.memory_space<vmem>>, vector<1x256xf32>
    %7 = vector.broadcast %6 : vector<1x256xf32> to vector<8x256xf32>
    %8 = arith.addf %5, %7 : vector<8x256xf32>
    %cst_6 = arith.constant 0.000000e+00 : f32
    %9 = vector.broadcast %cst_6 : f32 to vector<8x256xf32>
    %10 = arith.maximumf %8, %9 : vector<8x256xf32>
    %c0_7 = arith.constant 0 : index
    %c0_8 = arith.constant 0 : index
    %11 = vector.load %arg9[%c0_7, %c0_8] : memref<8x512xf32, #tpu.memory_space<vmem>>, vector<8x512xf32>
    %12 = arith.truncf %10 : vector<8x256xf32> to vector<8x256xbf16>
    %c0_9 = arith.constant 0 : index
    %c0_10 = arith.constant 0 : index
    %13 = vector.load %arg4[%c0_9, %c0_10] : memref<256x512xbf16, #tpu.memory_space<vmem>>, vector<256x512xbf16>
    %cst_11 = arith.constant dense<0.000000e+00> : vector<8x512xf32>
    %14 = tpu.matmul %12, %13, %cst_11 {dimension_numbers = #tpu.dot_dimension_numbers<[1], [0], [0], [1], [0, 0, 1, 1], [], []>} : vector<8x256xbf16>, vector<256x512xbf16>, vector<8x512xf32> -> vector<8x512xf32>
    %15 = arith.addf %11, %14 : vector<8x512xf32>
    %c0_12 = arith.constant 0 : index
    %c0_13 = arith.constant 0 : index
    %16 = vector.load %arg9[%c0_12, %c0_13] : memref<8x512xf32, #tpu.memory_space<vmem>>, vector<8x512xf32>
    tpu.vector_store %arg9[%c0_12, %c0_13], %15 {strides = array<i32>} : memref<8x512xf32, #tpu.memory_space<vmem>>, vector<8x512xf32>,
    %c3_i32 = arith.constant 3 : i32
    %17 = arith.cmpi eq, %arg0, %c3_i32 : i32
    %18 = arith.extui %17 : i1 to i32
    %c0_i32_14 = arith.constant 0 : i32
    %19 = arith.cmpi ne, %18, %c0_i32_14 : i32
    scf.if %19 {
      %c0_15 = arith.constant 0 : index
      %c0_16 = arith.constant 0 : index
      %20 = vector.load %arg9[%c0_15, %c0_16] : memref<8x512xf32, #tpu.memory_space<vmem>>, vector<8x512xf32>
      %c0_17 = arith.constant 0 : index
      %c0_18 = arith.constant 0 : index
      %21 = vector.load %arg5[%c0_17, %c0_18] : memref<1x512xf32, #tpu.memory_space<vmem>>, vector<1x512xf32>
      %22 = vector.broadcast %21 : vector<1x512xf32> to vector<8x512xf32>
      %23 = arith.addf %20, %22 : vector<8x512xf32>
      %cst_19 = arith.constant 0.000000e+00 : f32
      %24 = vector.broadcast %cst_19 : f32 to vector<8x512xf32>
      %25 = arith.maximumf %23, %24 : vector<8x512xf32>
      %26 = arith.truncf %25 : vector<8x512xf32> to vector<8x512xbf16>
      %c0_20 = arith.constant 0 : index
      %c0_21 = arith.constant 0 : index
      %27 = vector.load %arg6[%c0_20, %c0_21] : memref<512x128xbf16, #tpu.memory_space<vmem>>, vector<512x128xbf16>
      %cst_22 = arith.constant dense<0.000000e+00> : vector<8x128xf32>
      %28 = tpu.matmul %26, %27, %cst_22 {dimension_numbers = #tpu.dot_dimension_numbers<[1], [0], [0], [1], [0, 0, 1, 1], [], []>} : vector<8x512xbf16>, vector<512x128xbf16>, vector<8x128xf32> -> vector<8x128xf32>
      %c0_23 = arith.constant 0 : index
      %c0_24 = arith.constant 0 : index
      %29 = vector.load %arg7[%c0_23, %c0_24] : memref<1x128xf32, #tpu.memory_space<vmem>>, vector<1x128xf32>
      %30 = vector.broadcast %29 : vector<1x128xf32> to vector<8x128xf32>
      %31 = arith.addf %28, %30 : vector<8x128xf32>
      %32 = arith.negf %31 : vector<8x128xf32>
      %33 = math.exp %32 : vector<8x128xf32>
      %cst_25 = arith.constant 1.000000e+00 : f32
      %34 = vector.broadcast %cst_25 : f32 to vector<8x128xf32>
      %35 = arith.addf %34, %33 : vector<8x128xf32>
      %36 = arith.divf %34, %35 : vector<8x128xf32>
      %c0_26 = arith.constant 0 : index
      %c0_27 = arith.constant 0 : index
      %37 = vector.load %arg8[%c0_26, %c0_27] : memref<8x128xf32, #tpu.memory_space<vmem>>, vector<8x128xf32>
      tpu.vector_store %arg8[%c0_26, %c0_27], %36 {strides = array<i32>} : memref<8x128xf32, #tpu.memory_space<vmem>>, vector<8x128xf32>,
    } else {
    }
    return
  }
  func.func @transform_0(%arg0: i32) -> (i32, i32) {
    %c0_i32 = arith.constant 0 : i32
    %c0_i32_0 = arith.constant 0 : i32
    %c0_i32_1 = arith.constant 0 : i32
    return %c0_i32, %c0_i32_0 : i32, i32
  }
  func.func @transform_1(%arg0: i32) -> (i32, i32) {
    %c0_i32 = arith.constant 0 : i32
    %c0_i32_0 = arith.constant 0 : i32
    return %c0_i32, %arg0 : i32, i32
  }
  func.func @transform_2(%arg0: i32) -> (i32, i32) {
    %c0_i32 = arith.constant 0 : i32
    %c0_i32_0 = arith.constant 0 : i32
    return %c0_i32, %arg0 : i32, i32
  }
  func.func @transform_3(%arg0: i32) -> (i32, i32) {
    %c0_i32 = arith.constant 0 : i32
    %c0_i32_0 = arith.constant 0 : i32
    return %arg0, %c0_i32 : i32, i32
  }
  func.func @transform_4(%arg0: i32) -> (i32, i32) {
    %c0_i32 = arith.constant 0 : i32
    %c0_i32_0 = arith.constant 0 : i32
    %c0_i32_1 = arith.constant 0 : i32
    return %c0_i32, %c0_i32_0 : i32, i32
  }
  func.func @transform_5(%arg0: i32) -> (i32, i32) {
    %c0_i32 = arith.constant 0 : i32
    %c0_i32_0 = arith.constant 0 : i32
    %c0_i32_1 = arith.constant 0 : i32
    return %c0_i32, %c0_i32_0 : i32, i32
  }
  func.func @transform_6(%arg0: i32) -> (i32, i32) {
    %c0_i32 = arith.constant 0 : i32
    %c0_i32_0 = arith.constant 0 : i32
    %c0_i32_1 = arith.constant 0 : i32
    return %c0_i32, %c0_i32_0 : i32, i32
  }
  func.func @transform_7(%arg0: i32) -> (i32, i32) {
    %c0_i32 = arith.constant 0 : i32
    %c0_i32_0 = arith.constant 0 : i32
    %c0_i32_1 = arith.constant 0 : i32
    return %c0_i32, %c0_i32_0 : i32, i32
  }
}

</mosaic_0001>

<llo_original>
// kernel: tpu_custom_call.1
$region0: #{tpu_custom_call.1}
  #allocation0 [shape = 'u32[]', space=smem, size = 0x4, offset = 0x4, fixed_abs, tag = 'smem constant byte address 0x4 - core index']
  #allocation1 [shape = 'u32[72,128]{1,0:T(1,128)}', space=vmem, size = 0x9000, scoped, tag = 'internal scratch']
  #allocation2 [shape = 'f32[8,512]{1,0:T(8,128)}', space=vmem, size = 0x4000, scoped, tag = 'scratch operand']
  %s0 = inlined_call_operand.hbm [shape: bf16[8,1024], index: 0, kind: input, shape index: {}]
  %s1 = inlined_call_operand.hbm [shape: bf16[1024,1024], index: 1, kind: input, shape index: {}]
  %s2 = inlined_call_operand.hbm [shape: f32[1,1024], index: 2, kind: input, shape index: {}]
  %s3 = inlined_call_operand.hbm [shape: bf16[1024,512], index: 3, kind: input, shape index: {}]
  %s4 = inlined_call_operand.hbm [shape: f32[1,512], index: 4, kind: input, shape index: {}]
  %s5 = inlined_call_operand.hbm [shape: bf16[512,128], index: 5, kind: input, shape index: {}]
  %s6 = inlined_call_operand.hbm [shape: f32[1,128], index: 6, kind: input, shape index: {}]
  %s7 = inlined_call_operand.hbm [shape: f32[8,128], index: 7, kind: output, shape index: {}]
  %s8 = sld [smem:[#allocation0]]
  $region97: #{tpu_custom_call.1} parent=0
    _
  %s10 = ssub.s32 1, %s8
  %s11 = scalar_select 0, %s10, %s8
  $region1: #{tpu_custom_call.1} parent=0
    #allocation3 [shape = 'u8[16384]{0}', space=vmem, size = 0x4000, scoped, tag = 'input window, operand 0, single buffered']
    #allocation4 [shape = 's32[2]{0}', space=sflag, size = 0x8, scoped, tag = 'scoped memory for tpu_custom_call.1']
    #allocation5 [shape = 's32[2]{0}', space=sflag, size = 0x8, scoped, tag = 'scoped memory for tpu_custom_call.1']
    #allocation6 [shape = 'u8[1048576]{0}', space=vmem, size = 0x100000, scoped, tag = 'input window, operand 1']
    #allocation7 [shape = 's32[2]{0}', space=sflag, size = 0x8, scoped, tag = 'scoped memory for tpu_custom_call.1']
    #allocation8 [shape = 'u8[2048]{0}', space=vmem, size = 0x800, scoped, tag = 'input window, operand 2']
    #allocation9 [shape = 'u8[524288]{0}', space=vmem, size = 0x80000, scoped, tag = 'input window, operand 3']
    #allocation10 [shape = 's32[2]{0}', space=sflag, size = 0x8, scoped, tag = 'scoped memory for tpu_custom_call.1']
    #allocation11 [shape = 'u8[2048]{0}', space=vmem, size = 0x800, scoped, tag = 'input window, operand 4, single buffered']
    #allocation12 [shape = 'u8[131072]{0}', space=vmem, size = 0x20000, scoped, tag = 'input window, operand 5, single buffered']
    #allocation13 [shape = 's32[1]{0}', space=sflag, size = 0x4, scoped, tag = 'scoped memory for tpu_custom_call.1']
    #allocation14 [shape = 'u8[512]{0}', space=vmem, size = 0x400, scoped, tag = 'input window, operand 6, single buffered']
    #allocation15 [shape = 'u8[4096]{0}', space=vmem, size = 0x1000, scoped, tag = 'output window, operand 0, single buffered']
    %12 = vsyncpa [#allocation4], 0
    %13 = vsyncpa [#allocation7], 0
    %s14 = scalar_lea.sflag [#allocation7], 1
    %15 = vsyncpa %s14, 0
    %16 = vsyncpa [#allocation10], 0
    %s17 = scalar_lea.sflag [#allocation10], 1
    %18 = vsyncpa %s17, 0
    %19 = vsyncpa [#allocation13], 0
    %20 = vsyncpa [#allocation5], 0
    loop: start=0, step=1, limit=6
    $region2: #{tpu_custom_call.1} parent=1 // loop_pre_header
      _
    $region3: #{tpu_custom_call.1} parent=1 // loop_header
      %s22 = sphi 0, %s26
      %p23 = scmp.ge.s32.totalorder %s22, 6
      %s30 = sphi 0, %s30
      %s32 = sphi 0, %s30
      %s33 = sphi 0, %s32
      %s47 = sphi 0, %s33
      %s53 = sphi 0, %s55
      %s56 = sphi 0, %s53
      %s57 = sphi 0, %s56
      %s73 = sphi 0, %s57
      %s79 = sphi 0, %s81
      %s82 = sphi 0, %s79
      %s83 = sphi 0, %s82
      %s99 = sphi 0, %s83
      %s105 = sphi 0, %s107
      %s108 = sphi 0, %s105
      %s109 = sphi 0, %s108
      %s125 = sphi 0, %s109
      %s129 = sphi 0, %s129
      %s131 = sphi 0, %s129
      %s132 = sphi 0, %s131
      %s146 = sphi 0, %s132
      %s150 = sphi 0, %s150
      %s152 = sphi 0, %s150
      %s153 = sphi 0, %s152
      %s167 = sphi 0, %s153
      %s171 = sphi 0, %s171
      %s173 = sphi 0, %s171
      %s174 = sphi 0, %s173
      %s188 = sphi 0, %s174
      %s192 = sphi 0, %s192
      %s194 = sphi 0, %s192
      %s195 = sphi 0, %s194
      %s209 = sphi 0, %s195
    $region4: #{tpu_custom_call.1} parent=1 // loop_header_branch
      %25 = sbr.rel (%p23) target = $region8
    $region5: #{tpu_custom_call.1} parent=1 // loop_body
      %s27 = ssub.s32 %s22, 1
      %s28 = ssub.s32 %s22, 2
      %s29 = sadd.s32 %s22, 1
      %s31 = sadd.s32 %s30, 1
      %p34 = scmp.eq.s32.totalorder %s22, 3
      %p35 = scmp.ne.s32.totalorder %s30, %s32
      %p36 = scmp.eq.s32.totalorder %s22, 0
      %p37 = por %p35, %p36
      %p38 = scmp.ne.s32.totalorder %s30, %s32
      %p39 = scmp.eq.s32.totalorder %s27, 3
      %p40 = por %p38, %p39
      %p41 = scmp.ne.s32.totalorder %s32, %s33
      %p42 = scmp.eq.s32.totalorder %s27, 0
      %p43 = por %p41, %p42
      %p44 = scmp.ne.s32.totalorder %s32, %s33
      %p45 = scmp.eq.s32.totalorder %s28, 3
      %p46 = por %p44, %p45
      %p48 = scmp.ne.s32.totalorder %s33, %s47
      %p49 = scmp.eq.s32.totalorder %s28, 0
      %p50 = por %p48, %p49
      %s51 = ssub.s32 %s22, %s29
      %p52 = scmp.eq.s32.totalorder %s51, 0
      %s54 = sadd.s32 %s53, 1
      %s55 = scalar_select %p52, %s53, %s54
      %p58 = pneg %p52
      %p59 = scmp.eq.s32.totalorder %s22, 3
      %p60 = por %p58, %p59
      %p61 = scmp.ne.s32.totalorder %s53, %s56
      %p62 = scmp.eq.s32.totalorder %s22, 0
      %p63 = por %p61, %p62
      %p64 = scmp.ne.s32.totalorder %s53, %s56
      %p65 = scmp.eq.s32.totalorder %s27, 3
      %p66 = por %p64, %p65
      %p67 = scmp.ne.s32.totalorder %s56, %s57
      %p68 = scmp.eq.s32.totalorder %s27, 0
      %p69 = por %p67, %p68
      %p70 = scmp.ne.s32.totalorder %s56, %s57
      %p71 = scmp.eq.s32.totalorder %s28, 3
      %p72 = por %p70, %p71
      %p74 = scmp.ne.s32.totalorder %s57, %s73
      %p75 = scmp.eq.s32.totalorder %s28, 0
      %p76 = por %p74, %p75
      %s77 = ssub.s32 %s22, %s29
      %p78 = scmp.eq.s32.totalorder %s77, 0
      %s80 = sadd.s32 %s79, 1
      %s81 = scalar_select %p78, %s79, %s80
      %p84 = pneg %p78
      %p85 = scmp.eq.s32.totalorder %s22, 3
      %p86 = por %p84, %p85
      %p87 = scmp.ne.s32.totalorder %s79, %s82
      %p88 = scmp.eq.s32.totalorder %s22, 0
      %p89 = por %p87, %p88
      %p90 = scmp.ne.s32.totalorder %s79, %s82
      %p91 = scmp.eq.s32.totalorder %s27, 3
      %p92 = por %p90, %p91
      %p93 = scmp.ne.s32.totalorder %s82, %s83
      %p94 = scmp.eq.s32.totalorder %s27, 0
      %p95 = por %p93, %p94
      %p96 = scmp.ne.s32.totalorder %s82, %s83
      %p97 = scmp.eq.s32.totalorder %s28, 3
      %p98 = por %p96, %p97
      %p100 = scmp.ne.s32.totalorder %s83, %s99
      %p101 = scmp.eq.s32.totalorder %s28, 0
      %p102 = por %p100, %p101
      %s103 = ssub.s32 %s22, %s29
      %p104 = scmp.eq.s32.totalorder %s103, 0
      %s106 = sadd.s32 %s105, 1
      %s107 = scalar_select %p104, %s105, %s106
      %p110 = pneg %p104
      %p111 = scmp.eq.s32.totalorder %s22, 3
      %p112 = por %p110, %p111
      %p113 = scmp.ne.s32.totalorder %s105, %s108
      %p114 = scmp.eq.s32.totalorder %s22, 0
      %p115 = por %p113, %p114
      %p116 = scmp.ne.s32.totalorder %s105, %s108
      %p117 = scmp.eq.s32.totalorder %s27, 3
      %p118 = por %p116, %p117
      %p119 = scmp.ne.s32.totalorder %s108, %s109
      %p120 = scmp.eq.s32.totalorder %s27, 0
      %p121 = por %p119, %p120
      %p122 = scmp.ne.s32.totalorder %s108, %s109
      %p123 = scmp.eq.s32.totalorder %s28, 3
      %p124 = por %p122, %p123
      %p126 = scmp.ne.s32.totalorder %s109, %s125
      %p127 = scmp.eq.s32.totalorder %s28, 0
      %p128 = por %p126, %p127
      %s130 = sadd.s32 %s129, 1
      %p133 = scmp.eq.s32.totalorder %s22, 3
      %p134 = scmp.ne.s32.totalorder %s129, %s131
      %p135 = scmp.eq.s32.totalorder %s22, 0
      %p136 = por %p134, %p135
      %p137 = scmp.ne.s32.totalorder %s129, %s131
      %p138 = scmp.eq.s32.totalorder %s27, 3
      %p139 = por %p137, %p138
      %p140 = scmp.ne.s32.totalorder %s131, %s132
      %p141 = scmp.eq.s32.totalorder %s27, 0
      %p142 = por %p140, %p141
      %p143 = scmp.ne.s32.totalorder %s131, %s132
      %p144 = scmp.eq.s32.totalorder %s28, 3
      %p145 = por %p143, %p144
      %p147 = scmp.ne.s32.totalorder %s132, %s146
      %p148 = scmp.eq.s32.totalorder %s28, 0
      %p149 = por %p147, %p148
      %s151 = sadd.s32 %s150, 1
      %p154 = scmp.eq.s32.totalorder %s22, 3
      %p155 = scmp.ne.s32.totalorder %s150, %s152
      %p156 = scmp.eq.s32.totalorder %s22, 0
      %p157 = por %p155, %p156
      %p158 = scmp.ne.s32.totalorder %s150, %s152
      %p159 = scmp.eq.s32.totalorder %s27, 3
      %p160 = por %p158, %p159
      %p161 = scmp.ne.s32.totalorder %s152, %s153
      %p162 = scmp.eq.s32.totalorder %s27, 0
      %p163 = por %p161, %p162
      %p164 = scmp.ne.s32.totalorder %s152, %s153
      %p165 = scmp.eq.s32.totalorder %s28, 3
      %p166 = por %p164, %p165
      %p168 = scmp.ne.s32.totalorder %s153, %s167
      %p169 = scmp.eq.s32.totalorder %s28, 0
      %p170 = por %p168, %p169
      %s172 = sadd.s32 %s171, 1
      %p175 = scmp.eq.s32.totalorder %s22, 3
      %p176 = scmp.ne.s32.totalorder %s171, %s173
      %p177 = scmp.eq.s32.totalorder %s22, 0
      %p178 = por %p176, %p177
      %p179 = scmp.ne.s32.totalorder %s171, %s173
      %p180 = scmp.eq.s32.totalorder %s27, 3
      %p181 = por %p179, %p180
      %p182 = scmp.ne.s32.totalorder %s173, %s174
      %p183 = scmp.eq.s32.totalorder %s27, 0
      %p184 = por %p182, %p183
      %p185 = scmp.ne.s32.totalorder %s173, %s174
      %p186 = scmp.eq.s32.totalorder %s28, 3
      %p187 = por %p185, %p186
      %p189 = scmp.ne.s32.totalorder %s174, %s188
      %p190 = scmp.eq.s32.totalorder %s28, 0
      %p191 = por %p189, %p190
      %s193 = sadd.s32 %s192, 1
      %p196 = scmp.eq.s32.totalorder %s22, 3
      %p197 = scmp.ne.s32.totalorder %s192, %s194
      %p198 = scmp.eq.s32.totalorder %s22, 0
      %p199 = por %p197, %p198
      %p200 = scmp.ne.s32.totalorder %s192, %s194
      %p201 = scmp.eq.s32.totalorder %s27, 3
      %p202 = por %p200, %p201
      %p203 = scmp.ne.s32.totalorder %s194, %s195
      %p204 = scmp.eq.s32.totalorder %s27, 0
      %p205 = por %p203, %p204
      %p206 = scmp.ne.s32.totalorder %s194, %s195
      %p207 = scmp.eq.s32.totalorder %s28, 3
      %p208 = por %p206, %p207
      %p210 = scmp.ne.s32.totalorder %s195, %s209
      %p211 = scmp.eq.s32.totalorder %s28, 0
      %p212 = por %p210, %p211
      %p213 = scmp.le.s32.totalorder 1, %s22
      %p214 = scmp.lt.s32.totalorder %s22, 5
      %p215 = pnand %p213, %p214
      %p216 = pneg %p215
      // Predicated region
      $region9: #{tpu_custom_call.1} parent=5 // pred_check
        _
      $region10: #{tpu_custom_call.1} parent=5 // pred_check_branch
        %218 = sbr.rel (%p215) target = $region12
      $region11: #{tpu_custom_call.1} parent=5 // pred_region
        %s219 = ssub.s32 %s22, 1
        // Predicated region
        $region13: #{tpu_custom_call.1} parent=11 // pred_check
          %p220 = pneg %p43
        $region14: #{tpu_custom_call.1} parent=11 // pred_check_branch
          %222 = sbr.rel (%p220) target = $region16
        $region15: #{tpu_custom_call.1} parent=11 // pred_region
          %224 = vsyncadd [#allocation4], 0
          %s226 = sshll.u32 %s0, 4
          %s227 = int_to_ptr.hbm [resolvable:$true] %s226
          %s228 = sshll.u32 [#allocation3], 4
          %s229 = int_to_ptr.vmem [resolvable:$true] %s228
          %231 = dma.hbm_to_vmem [thread:$0]  %s227, 512, %s229, [#allocation4]
        $region16: #{tpu_custom_call.1} parent=11 // pred_fallthru
          _
        // Predicated region
        $region17: #{tpu_custom_call.1} parent=11 // pred_check
          %p232 = pneg %p142
        $region18: #{tpu_custom_call.1} parent=11 // pred_check_branch
          %234 = sbr.rel (%p232) target = $region20
        $region19: #{tpu_custom_call.1} parent=11 // pred_region
          %236 = vsyncadd [#allocation10], 0
          %s238 = sshll.u32 %s4, 4
          %s239 = int_to_ptr.hbm [resolvable:$true] %s238
          %s240 = sshll.u32 [#allocation11], 4
          %s241 = int_to_ptr.vmem [resolvable:$true] %s240
          %243 = dma.hbm_to_vmem [thread:$0]  %s239, 64, %s241, [#allocation10]
        $region20: #{tpu_custom_call.1} parent=11 // pred_fallthru
          _
        // Predicated region
        $region21: #{tpu_custom_call.1} parent=11 // pred_check
          %p244 = pneg %p163
        $region22: #{tpu_custom_call.1} parent=11 // pred_check_branch
          %246 = sbr.rel (%p244) target = $region24
        $region23: #{tpu_custom_call.1} parent=11 // pred_region
          %248 = vsyncadd [#allocation13], 0
          %s249 = sshll.u32 %s5, 4
          %s250 = int_to_ptr.hbm [resolvable:$true] %s249
          %s251 = sshll.u32 [#allocation12], 4
          %s252 = int_to_ptr.vmem [resolvable:$true] %s251
          %257 = dma.hbm_to_vmem [thread:$0]  %s250, 4096, %s252, [#allocation13], 64, 64, 4
        $region24: #{tpu_custom_call.1} parent=11 // pred_fallthru
          _
        // Predicated region
        $region25: #{tpu_custom_call.1} parent=11 // pred_check
          %p258 = pneg %p184
        $region26: #{tpu_custom_call.1} parent=11 // pred_check_branch
          %260 = sbr.rel (%p258) target = $region28
        $region27: #{tpu_custom_call.1} parent=11 // pred_region
          %262 = vsyncadd [#allocation13], 0
          %s264 = sshll.u32 %s6, 4
          %s265 = int_to_ptr.hbm [resolvable:$true] %s264
          %s266 = sshll.u32 [#allocation14], 4
          %s267 = int_to_ptr.vmem [resolvable:$true] %s266
          %269 = dma.hbm_to_vmem [thread:$0]  %s265, 16, %s267, [#allocation13]
        $region28: #{tpu_custom_call.1} parent=11 // pred_fallthru
          _
      $region12: #{tpu_custom_call.1} parent=5 // pred_fallthru
        _
      %p270 = scmp.lt.s32.totalorder %s22, 4
      // Predicated region
      $region29: #{tpu_custom_call.1} parent=5 // pred_check
        %p271 = pneg %p270
      $region30: #{tpu_custom_call.1} parent=5 // pred_check_branch
        %273 = sbr.rel (%p271) target = $region32
      $region31: #{tpu_custom_call.1} parent=5 // pred_region
        // Predicated region
        $region33: #{tpu_custom_call.1} parent=31 // pred_check
          %p274 = pneg %p63
        $region34: #{tpu_custom_call.1} parent=31 // pred_check_branch
          %276 = sbr.rel (%p274) target = $region36
        $region35: #{tpu_custom_call.1} parent=31 // pred_region
          %s277 = sand.u32 %s22, 1
          %s278 = scalar_lea.sflag [#allocation7], %s277
          %s279 = sand.u32 %s53, 1
          %s280 = smul.addr %s279, 1024
          %s281 = scalar_lea.vmem [#allocation6], %s280
          %s282 = smul.u32 2, %s22
          %284 = vsyncadd %s278, 0
          %s285 = smul.addr %s282, 4
          %s286 = scalar_lea.hbm %s1, %s285
          %s287 = sshll.u32 %s286, 4
          %s288 = int_to_ptr.hbm [resolvable:$true] %s287
          %s289 = sshll.u32 %s281, 4
          %s290 = int_to_ptr.vmem [resolvable:$true] %s289
          %295 = dma.hbm_to_vmem [thread:$0]  %s288, 16384, %s290, %s278, 512, 128, 8
        $region36: #{tpu_custom_call.1} parent=31 // pred_fallthru
          _
        // Predicated region
        $region37: #{tpu_custom_call.1} parent=31 // pred_check
          %p296 = pneg %p89
        $region38: #{tpu_custom_call.1} parent=31 // pred_check_branch
          %298 = sbr.rel (%p296) target = $region40
        $region39: #{tpu_custom_call.1} parent=31 // pred_region
          %s299 = sand.u32 %s22, 1
          %s300 = scalar_lea.sflag [#allocation7], %s299
          %s301 = sand.u32 %s79, 1
          %s302 = smul.addr %s301, 2
          %s303 = scalar_lea.vmem [#allocation8], %s302
          %s304 = smul.u32 2, %s22
          %306 = vsyncadd %s300, 0
          %s307 = scalar_lea.hbm %s2, %s304
          %s309 = sshll.u32 %s307, 4
          %s310 = int_to_ptr.hbm [resolvable:$true] %s309
          %s311 = sshll.u32 %s303, 4
          %s312 = int_to_ptr.vmem [resolvable:$true] %s311
          %314 = dma.hbm_to_vmem [thread:$0]  %s310, 32, %s312, %s300
        $region40: #{tpu_custom_call.1} parent=31 // pred_fallthru
          _
        // Predicated region
        $region41: #{tpu_custom_call.1} parent=31 // pred_check
          %p315 = pneg %p115
        $region42: #{tpu_custom_call.1} parent=31 // pred_check_branch
          %317 = sbr.rel (%p315) target = $region44
        $region43: #{tpu_custom_call.1} parent=31 // pred_region
          %s318 = sand.u32 %s22, 1
          %s319 = scalar_lea.sflag [#allocation10], %s318
          %s320 = sand.u32 %s105, 1
          %s321 = smul.addr %s320, 512
          %s322 = scalar_lea.vmem [#allocation9], %s321
          %s323 = smul.u32 32, %s22
          %325 = vsyncadd %s319, 0
          %s326 = smul.addr %s323, 4
          %s327 = smul.addr %s326, 4
          %s328 = scalar_lea.hbm %s3, %s327
          %s329 = sshll.u32 %s328, 4
          %s330 = int_to_ptr.hbm [resolvable:$true] %s329
          %s331 = sshll.u32 %s322, 4
          %s332 = int_to_ptr.vmem [resolvable:$true] %s331
          %337 = dma.hbm_to_vmem [thread:$0]  %s330, 8192, %s332, %s319, 256, 256, 16
        $region44: #{tpu_custom_call.1} parent=31 // pred_fallthru
          _
      $region32: #{tpu_custom_call.1} parent=5 // pred_fallthru
        _
      %p338 = scmp.le.s32.totalorder 1, %s22
      %p339 = scmp.lt.s32.totalorder %s22, 5
      %p340 = pnand %p338, %p339
      %p341 = pneg %p340
      // Predicated region
      $region45: #{tpu_custom_call.1} parent=5 // pred_check
        _
      $region46: #{tpu_custom_call.1} parent=5 // pred_check_branch
        %343 = sbr.rel (%p340) target = $region48
      $region47: #{tpu_custom_call.1} parent=5 // pred_region
        %s344 = ssub.s32 %s22, 1
        // Predicated region
        $region49: #{tpu_custom_call.1} parent=47 // pred_check
          %p345 = pneg %p43
        $region50: #{tpu_custom_call.1} parent=47 // pred_check_branch
          %347 = sbr.rel (%p345) target = $region52
        $region51: #{tpu_custom_call.1} parent=47 // pred_region
          %349 = dma.done [#allocation4], 512
        $region52: #{tpu_custom_call.1} parent=47 // pred_fallthru
          _
        %s350 = sand.u32 %s27, 1
        %s351 = scalar_lea.sflag [#allocation7], %s350
        %s352 = sand.u32 %s56, 1
        %s353 = smul.addr %s352, 1024
        %s354 = scalar_lea.vmem [#allocation6], %s353
        // Predicated region
        $region53: #{tpu_custom_call.1} parent=47 // pred_check
          %p355 = pneg %p69
        $region54: #{tpu_custom_call.1} parent=47 // pred_check_branch
          %357 = sbr.rel (%p355) target = $region56
        $region55: #{tpu_custom_call.1} parent=47 // pred_region
          %359 = dma.done %s351, 16384
        $region56: #{tpu_custom_call.1} parent=47 // pred_fallthru
          _
        %s360 = sand.u32 %s27, 1
        %s361 = scalar_lea.sflag [#allocation7], %s360
        %s362 = sand.u32 %s82, 1
        %s363 = smul.addr %s362, 2
        %s364 = scalar_lea.vmem [#allocation8], %s363
        // Predicated region
        $region57: #{tpu_custom_call.1} parent=47 // pred_check
          %p365 = pneg %p95
        $region58: #{tpu_custom_call.1} parent=47 // pred_check_branch
          %367 = sbr.rel (%p365) target = $region60
        $region59: #{tpu_custom_call.1} parent=47 // pred_region
          %369 = dma.done %s361, 32
        $region60: #{tpu_custom_call.1} parent=47 // pred_fallthru
          _
        %s370 = sand.u32 %s27, 1
        %s371 = scalar_lea.sflag [#allocation10], %s370
        %s372 = sand.u32 %s108, 1
        %s373 = smul.addr %s372, 512
        %s374 = scalar_lea.vmem [#allocation9], %s373
        // Predicated region
        $region61: #{tpu_custom_call.1} parent=47 // pred_check
          %p375 = pneg %p121
        $region62: #{tpu_custom_call.1} parent=47 // pred_check_branch
          %377 = sbr.rel (%p375) target = $region64
        $region63: #{tpu_custom_call.1} parent=47 // pred_region
          %379 = dma.done %s371, 8192
        $region64: #{tpu_custom_call.1} parent=47 // pred_fallthru
          _
        // Predicated region
        $region65: #{tpu_custom_call.1} parent=47 // pred_check
          %p380 = pneg %p142
        $region66: #{tpu_custom_call.1} parent=47 // pred_check_branch
          %382 = sbr.rel (%p380) target = $region68
        $region67: #{tpu_custom_call.1} parent=47 // pred_region
          %384 = dma.done [#allocation10], 64
        $region68: #{tpu_custom_call.1} parent=47 // pred_fallthru
          _
        // Predicated region
        $region69: #{tpu_custom_call.1} parent=47 // pred_check
          %p385 = pneg %p163
        $region70: #{tpu_custom_call.1} parent=47 // pred_check_branch
          %387 = sbr.rel (%p385) target = $region72
        $region71: #{tpu_custom_call.1} parent=47 // pred_region
          %389 = dma.done [#allocation13], 4096
        $region72: #{tpu_custom_call.1} parent=47 // pred_fallthru
          _
        // Predicated region
        $region73: #{tpu_custom_call.1} parent=47 // pred_check
          %p390 = pneg %p184
        $region74: #{tpu_custom_call.1} parent=47 // pred_check_branch
          %392 = sbr.rel (%p390) target = $region76
        $region75: #{tpu_custom_call.1} parent=47 // pred_region
          %394 = dma.done [#allocation13], 16
        $region76: #{tpu_custom_call.1} parent=47 // pred_fallthru
          _
        %p395 = pneg %p43
        %p396 = pneg %p40
        %s397 = sand.u32 %s27, 1
        %s398 = scalar_lea.sflag [#allocation7], %s397
        %s399 = sand.u32 %s56, 1
        %s400 = smul.addr %s399, 1024
        %s401 = scalar_lea.vmem [#allocation6], %s400
        %p402 = pneg %p69
        %p403 = pneg %p66
        %s404 = sand.u32 %s27, 1
        %s405 = scalar_lea.sflag [#allocation7], %s404
        %s406 = sand.u32 %s82, 1
        %s407 = smul.addr %s406, 2
        %s408 = scalar_lea.vmem [#allocation8], %s407
        %p409 = pneg %p95
        %p410 = pneg %p92
        %s411 = sand.u32 %s27, 1
        %s412 = scalar_lea.sflag [#allocation10], %s411
        %s413 = sand.u32 %s108, 1
        %s414 = smul.addr %s413, 512
        %s415 = scalar_lea.vmem [#allocation9], %s414
        %p416 = pneg %p121
        %p417 = pneg %p118
        %p418 = pneg %p142
        %p419 = pneg %p139
        %p420 = pneg %p163
        %p421 = pneg %p160
        %p422 = pneg %p184
        %p423 = pneg %p181
        %p424 = pneg %p205
        %p425 = pneg %p202
        %s426 = smul.u32 2, %s27
        %s427 = smul.u32 2, %s27
        %s428 = smul.u32 32, %s27
        %p429 = scmp.eq.s32.totalorder %s27, 0
        // Predicated region
        $region77: #{tpu_custom_call.1} parent=47 // pred_check
          %p430 = pneg %p429
        $region78: #{tpu_custom_call.1} parent=47 // pred_check_branch
          %432 = sbr.rel (%p430) target = $region80
        $region79: #{tpu_custom_call.1} parent=47 // pred_region
          %433 = vst [vmem:[#allocation2] sm:$0xff] 0.0
          %434 = vst [vmem:[#allocation2 + $0x8] sm:$0xff] 0.0
          %435 = vst [vmem:[#allocation2 + $0x10] sm:$0xff] 0.0
          %436 = vst [vmem:[#allocation2 + $0x18] sm:$0xff] 0.0
        $region80: #{tpu_custom_call.1} parent=47 // pred_fallthru
          _
        %v437 = vld [vmem:[#allocation3] sm:$0xff]
        %v438 = vld [vmem:[#allocation3 + $0x8] sm:$0xff]
        %v439 = vld [vmem:[#allocation3 + $0x10] sm:$0xff]
        %v440 = vld [vmem:[#allocation3 + $0x18] sm:$0xff]
        %v441 = vld [vmem:[%s354] sm:$0xff]
        %v442 = vld [vmem:[%s354 + $0x8] sm:$0xff]
        %v443 = vld [vmem:[%s354 + $0x10] sm:$0xff]
        %v444 = vld [vmem:[%s354 + $0x18] sm:$0xff]
        %v445 = vld [vmem:[%s354 + $0x20] sm:$0xff]
        %v446 = vld [vmem:[%s354 + $0x28] sm:$0xff]
        %v447 = vld [vmem:[%s354 + $0x30] sm:$0xff]
        %v448 = vld [vmem:[%s354 + $0x38] sm:$0xff]
        %v449 = vld [vmem:[%s354 + $0x40] sm:$0xff]
        %v450 = vld [vmem:[%s354 + $0x48] sm:$0xff]
        %v451 = vld [vmem:[%s354 + $0x50] sm:$0xff]
        %v452 = vld [vmem:[%s354 + $0x58] sm:$0xff]
        %v453 = vld [vmem:[%s354 + $0x60] sm:$0xff]
        %v454 = vld [vmem:[%s354 + $0x68] sm:$0xff]
        %v455 = vld [vmem:[%s354 + $0x70] sm:$0xff]
        %v456 = vld [vmem:[%s354 + $0x78] sm:$0xff]
        %v457 = vld [vmem:[%s354 + $0x80] sm:$0xff]
        %v458 = vld [vmem:[%s354 + $0x88] sm:$0xff]
        %v459 = vld [vmem:[%s354 + $0x90] sm:$0xff]
        %v460 = vld [vmem:[%s354 + $0x98] sm:$0xff]
        %v461 = vld [vmem:[%s354 + $0xa0] sm:$0xff]
        %v462 = vld [vmem:[%s354 + $0xa8] sm:$0xff]
        %v463 = vld [vmem:[%s354 + $0xb0] sm:$0xff]
        %v464 = vld [vmem:[%s354 + $0xb8] sm:$0xff]
        %v465 = vld [vmem:[%s354 + $0xc0] sm:$0xff]
        %v466 = vld [vmem:[%s354 + $0xc8] sm:$0xff]
        %v467 = vld [vmem:[%s354 + $0xd0] sm:$0xff]
        %v468 = vld [vmem:[%s354 + $0xd8] sm:$0xff]
        %v469 = vld [vmem:[%s354 + $0xe0] sm:$0xff]
        %v470 = vld [vmem:[%s354 + $0xe8] sm:$0xff]
        %v471 = vld [vmem:[%s354 + $0xf0] sm:$0xff]
        %v472 = vld [vmem:[%s354 + $0xf8] sm:$0xff]
        %v473 = vld [vmem:[%s354 + $0x100] sm:$0xff]
        %v474 = vld [vmem:[%s354 + $0x108] sm:$0xff]
        %v475 = vld [vmem:[%s354 + $0x110] sm:$0xff]
        %v476 = vld [vmem:[%s354 + $0x118] sm:$0xff]
        %v477 = vld [vmem:[%s354 + $0x120] sm:$0xff]
        %v478 = vld [vmem:[%s354 + $0x128] sm:$0xff]
        %v479 = vld [vmem:[%s354 + $0x130] sm:$0xff]
        %v480 = vld [vmem:[%s354 + $0x138] sm:$0xff]
        %v481 = vld [vmem:[%s354 + $0x140] sm:$0xff]
        %v482 = vld [vmem:[%s354 + $0x148] sm:$0xff]
        %v483 = vld [vmem:[%s354 + $0x150] sm:$0xff]
        %v484 = vld [vmem:[%s354 + $0x158] sm:$0xff]
        %v485 = vld [vmem:[%s354 + $0x160] sm:$0xff]
        %v486 = vld [vmem:[%s354 + $0x168] sm:$0xff]
        %v487 = vld [vmem:[%s354 + $0x170] sm:$0xff]
        %v488 = vld [vmem:[%s354 + $0x178] sm:$0xff]
        %v489 = vld [vmem:[%s354 + $0x180] sm:$0xff]
        %v490 = vld [vmem:[%s354 + $0x188] sm:$0xff]
        %v491 = vld [vmem:[%s354 + $0x190] sm:$0xff]
        %v492 = vld [vmem:[%s354 + $0x198] sm:$0xff]
        %v493 = vld [vmem:[%s354 + $0x1a0] sm:$0xff]
        %v494 = vld [vmem:[%s354 + $0x1a8] sm:$0xff]
        %v495 = vld [vmem:[%s354 + $0x1b0] sm:$0xff]
        %v496 = vld [vmem:[%s354 + $0x1b8] sm:$0xff]
        %v497 = vld [vmem:[%s354 + $0x1c0] sm:$0xff]
        %v498 = vld [vmem:[%s354 + $0x1c8] sm:$0xff]
        %v499 = vld [vmem:[%s354 + $0x1d0] sm:$0xff]
        %v500 = vld [vmem:[%s354 + $0x1d8] sm:$0xff]
        %v501 = vld [vmem:[%s354 + $0x1e0] sm:$0xff]
        %v502 = vld [vmem:[%s354 + $0x1e8] sm:$0xff]
        %v503 = vld [vmem:[%s354 + $0x1f0] sm:$0xff]
        %v504 = vld [vmem:[%s354 + $0x1f8] sm:$0xff]
        %v505 = vld [vmem:[%s354 + $0x200] sm:$0xff]
        %v506 = vld [vmem:[%s354 + $0x208] sm:$0xff]
        %v507 = vld [vmem:[%s354 + $0x210] sm:$0xff]
        %v508 = vld [vmem:[%s354 + $0x218] sm:$0xff]
        %v509 = vld [vmem:[%s354 + $0x220] sm:$0xff]
        %v510 = vld [vmem:[%s354 + $0x228] sm:$0xff]
        %v511 = vld [vmem:[%s354 + $0x230] sm:$0xff]
        %v512 = vld [vmem:[%s354 + $0x238] sm:$0xff]
        %v513 = vld [vmem:[%s354 + $0x240] sm:$0xff]
        %v514 = vld [vmem:[%s354 + $0x248] sm:$0xff]
        %v515 = vld [vmem:[%s354 + $0x250] sm:$0xff]
        %v516 = vld [vmem:[%s354 + $0x258] sm:$0xff]
        %v517 = vld [vmem:[%s354 + $0x260] sm:$0xff]
        %v518 = vld [vmem:[%s354 + $0x268] sm:$0xff]
        %v519 = vld [vmem:[%s354 + $0x270] sm:$0xff]
        %v520 = vld [vmem:[%s354 + $0x278] sm:$0xff]
        %v521 = vld [vmem:[%s354 + $0x280] sm:$0xff]
        %v522 = vld [vmem:[%s354 + $0x288] sm:$0xff]
        %v523 = vld [vmem:[%s354 + $0x290] sm:$0xff]
        %v524 = vld [vmem:[%s354 + $0x298] sm:$0xff]
        %v525 = vld [vmem:[%s354 + $0x2a0] sm:$0xff]
        %v526 = vld [vmem:[%s354 + $0x2a8] sm:$0xff]
        %v527 = vld [vmem:[%s354 + $0x2b0] sm:$0xff]
        %v528 = vld [vmem:[%s354 + $0x2b8] sm:$0xff]
        %v529 = vld [vmem:[%s354 + $0x2c0] sm:$0xff]
        %v530 = vld [vmem:[%s354 + $0x2c8] sm:$0xff]
        %v531 = vld [vmem:[%s354 + $0x2d0] sm:$0xff]
        %v532 = vld [vmem:[%s354 + $0x2d8] sm:$0xff]
        %v533 = vld [vmem:[%s354 + $0x2e0] sm:$0xff]
        %v534 = vld [vmem:[%s354 + $0x2e8] sm:$0xff]
        %v535 = vld [vmem:[%s354 + $0x2f0] sm:$0xff]
        %v536 = vld [vmem:[%s354 + $0x2f8] sm:$0xff]
        %v537 = vld [vmem:[%s354 + $0x300] sm:$0xff]
        %v538 = vld [vmem:[%s354 + $0x308] sm:$0xff]
        %v539 = vld [vmem:[%s354 + $0x310] sm:$0xff]
        %v540 = vld [vmem:[%s354 + $0x318] sm:$0xff]
        %v541 = vld [vmem:[%s354 + $0x320] sm:$0xff]
        %v542 = vld [vmem:[%s354 + $0x328] sm:$0xff]
        %v543 = vld [vmem:[%s354 + $0x330] sm:$0xff]
        %v544 = vld [vmem:[%s354 + $0x338] sm:$0xff]
        %v545 = vld [vmem:[%s354 + $0x340] sm:$0xff]
        %v546 = vld [vmem:[%s354 + $0x348] sm:$0xff]
        %v547 = vld [vmem:[%s354 + $0x350] sm:$0xff]
        %v548 = vld [vmem:[%s354 + $0x358] sm:$0xff]
        %v549 = vld [vmem:[%s354 + $0x360] sm:$0xff]
        %v550 = vld [vmem:[%s354 + $0x368] sm:$0xff]
        %v551 = vld [vmem:[%s354 + $0x370] sm:$0xff]
        %v552 = vld [vmem:[%s354 + $0x378] sm:$0xff]
        %v553 = vld [vmem:[%s354 + $0x380] sm:$0xff]
        %v554 = vld [vmem:[%s354 + $0x388] sm:$0xff]
        %v555 = vld [vmem:[%s354 + $0x390] sm:$0xff]
        %v556 = vld [vmem:[%s354 + $0x398] sm:$0xff]
        %v557 = vld [vmem:[%s354 + $0x3a0] sm:$0xff]
        %v558 = vld [vmem:[%s354 + $0x3a8] sm:$0xff]
        %v559 = vld [vmem:[%s354 + $0x3b0] sm:$0xff]
        %v560 = vld [vmem:[%s354 + $0x3b8] sm:$0xff]
        %v561 = vld [vmem:[%s354 + $0x3c0] sm:$0xff]
        %v562 = vld [vmem:[%s354 + $0x3c8] sm:$0xff]
        %v563 = vld [vmem:[%s354 + $0x3d0] sm:$0xff]
        %v564 = vld [vmem:[%s354 + $0x3d8] sm:$0xff]
        %v565 = vld [vmem:[%s354 + $0x3e0] sm:$0xff]
        %v566 = vld [vmem:[%s354 + $0x3e8] sm:$0xff]
        %v567 = vld [vmem:[%s354 + $0x3f0] sm:$0xff]
        %v568 = vld [vmem:[%s354 + $0x3f8] sm:$0xff]
        %v569 = vld [vmem:[%s364] sm:$0x3]
        %v571 = vperm.slane %v569, 0
        %v572 = vperm.slane %v569, 1
        %v579 = vunpack.c.l.b16 %v437
        %v580 = vunpack.c.h.b16 %v437
        %v581 = vunpack.c.l.b16 %v438
        %v582 = vunpack.c.h.b16 %v438
        %v583 = vunpack.c.l.b16 %v439
        %v584 = vunpack.c.h.b16 %v439
        %v585 = vunpack.c.l.b16 %v440
        %v586 = vunpack.c.h.b16 %v440
        %v587 = vpack.c.b16 %v579, %v579
        %v588 = vpack.c.b16 %v580, %v580
        %v589 = vpack.c.b16 %v581, %v581
        %v590 = vpack.c.b16 %v582, %v582
        %v591 = vpack.c.b16 %v583, %v583
        %v592 = vpack.c.b16 %v584, %v584
        %v593 = vpack.c.b16 %v585, %v585
        %v594 = vpack.c.b16 %v586, %v586
        %v731 = vunpack.c.l.b16 %v441
        %v732 = vunpack.c.h.b16 %v441
        %v733 = vunpack.c.l.b16 %v442
        %v734 = vunpack.c.h.b16 %v442
        %v735 = vunpack.c.l.b16 %v443
        %v736 = vunpack.c.h.b16 %v443
        %v737 = vunpack.c.l.b16 %v444
        %v738 = vunpack.c.h.b16 %v444
        %v739 = vunpack.c.l.b16 %v445
        %v740 = vunpack.c.h.b16 %v445
        %v741 = vunpack.c.l.b16 %v446
        %v742 = vunpack.c.h.b16 %v446
        %v743 = vunpack.c.l.b16 %v447
        %v744 = vunpack.c.h.b16 %v447
        %v745 = vunpack.c.l.b16 %v448
        %v746 = vunpack.c.h.b16 %v448
        %v747 = vunpack.c.l.b16 %v449
        %v748 = vunpack.c.h.b16 %v449
        %v749 = vunpack.c.l.b16 %v450
        %v750 = vunpack.c.h.b16 %v450
        %v751 = vunpack.c.l.b16 %v451
        %v752 = vunpack.c.h.b16 %v451
        %v753 = vunpack.c.l.b16 %v452
        %v754 = vunpack.c.h.b16 %v452
        %v755 = vunpack.c.l.b16 %v453
        %v756 = vunpack.c.h.b16 %v453
        %v757 = vunpack.c.l.b16 %v454
        %v758 = vunpack.c.h.b16 %v454
        %v759 = vunpack.c.l.b16 %v455
        %v760 = vunpack.c.h.b16 %v455
        %v761 = vunpack.c.l.b16 %v456
        %v762 = vunpack.c.h.b16 %v456
        %v763 = vunpack.c.l.b16 %v457
        %v764 = vunpack.c.h.b16 %v457
        %v765 = vunpack.c.l.b16 %v458
        %v766 = vunpack.c.h.b16 %v458
        %v767 = vunpack.c.l.b16 %v459
        %v768 = vunpack.c.h.b16 %v459
        %v769 = vunpack.c.l.b16 %v460
        %v770 = vunpack.c.h.b16 %v460
        %v771 = vunpack.c.l.b16 %v461
        %v772 = vunpack.c.h.b16 %v461
        %v773 = vunpack.c.l.b16 %v462
        %v774 = vunpack.c.h.b16 %v462
        %v775 = vunpack.c.l.b16 %v463
        %v776 = vunpack.c.h.b16 %v463
        %v777 = vunpack.c.l.b16 %v464
        %v778 = vunpack.c.h.b16 %v464
        %v779 = vunpack.c.l.b16 %v465
        %v780 = vunpack.c.h.b16 %v465
        %v781 = vunpack.c.l.b16 %v466
        %v782 = vunpack.c.h.b16 %v466
        %v783 = vunpack.c.l.b16 %v467
        %v784 = vunpack.c.h.b16 %v467
        %v785 = vunpack.c.l.b16 %v468
        %v786 = vunpack.c.h.b16 %v468
        %v787 = vunpack.c.l.b16 %v469
        %v788 = vunpack.c.h.b16 %v469
        %v789 = vunpack.c.l.b16 %v470
        %v790 = vunpack.c.h.b16 %v470
        %v791 = vunpack.c.l.b16 %v471
        %v792 = vunpack.c.h.b16 %v471
        %v793 = vunpack.c.l.b16 %v472
        %v794 = vunpack.c.h.b16 %v472
        %v795 = vunpack.c.l.b16 %v473
        %v796 = vunpack.c.h.b16 %v473
        %v797 = vunpack.c.l.b16 %v474
        %v798 = vunpack.c.h.b16 %v474
        %v799 = vunpack.c.l.b16 %v475
        %v800 = vunpack.c.h.b16 %v475
        %v801 = vunpack.c.l.b16 %v476
        %v802 = vunpack.c.h.b16 %v476
        %v803 = vunpack.c.l.b16 %v477
        %v804 = vunpack.c.h.b16 %v477
        %v805 = vunpack.c.l.b16 %v478
        %v806 = vunpack.c.h.b16 %v478
        %v807 = vunpack.c.l.b16 %v479
        %v808 = vunpack.c.h.b16 %v479
        %v809 = vunpack.c.l.b16 %v480
        %v810 = vunpack.c.h.b16 %v480
        %v811 = vunpack.c.l.b16 %v481
        %v812 = vunpack.c.h.b16 %v481
        %v813 = vunpack.c.l.b16 %v482
        %v814 = vunpack.c.h.b16 %v482
        %v815 = vunpack.c.l.b16 %v483
        %v816 = vunpack.c.h.b16 %v483
        %v817 = vunpack.c.l.b16 %v484
        %v818 = vunpack.c.h.b16 %v484
        %v819 = vunpack.c.l.b16 %v485
        %v820 = vunpack.c.h.b16 %v485
        %v821 = vunpack.c.l.b16 %v486
        %v822 = vunpack.c.h.b16 %v486
        %v823 = vunpack.c.l.b16 %v487
        %v824 = vunpack.c.h.b16 %v487
        %v825 = vunpack.c.l.b16 %v488
        %v826 = vunpack.c.h.b16 %v488
        %v827 = vunpack.c.l.b16 %v489
        %v828 = vunpack.c.h.b16 %v489
        %v829 = vunpack.c.l.b16 %v490
        %v830 = vunpack.c.h.b16 %v490
        %v831 = vunpack.c.l.b16 %v491
        %v832 = vunpack.c.h.b16 %v491
        %v833 = vunpack.c.l.b16 %v492
        %v834 = vunpack.c.h.b16 %v492
        %v835 = vunpack.c.l.b16 %v493
        %v836 = vunpack.c.h.b16 %v493
        %v837 = vunpack.c.l.b16 %v494
        %v838 = vunpack.c.h.b16 %v494
        %v839 = vunpack.c.l.b16 %v495
        %v840 = vunpack.c.h.b16 %v495
        %v841 = vunpack.c.l.b16 %v496
        %v842 = vunpack.c.h.b16 %v496
        %v843 = vunpack.c.l.b16 %v497
        %v844 = vunpack.c.h.b16 %v497
        %v845 = vunpack.c.l.b16 %v498
        %v846 = vunpack.c.h.b16 %v498
        %v847 = vunpack.c.l.b16 %v499
        %v848 = vunpack.c.h.b16 %v499
        %v849 = vunpack.c.l.b16 %v500
        %v850 = vunpack.c.h.b16 %v500
        %v851 = vunpack.c.l.b16 %v501
        %v852 = vunpack.c.h.b16 %v501
        %v853 = vunpack.c.l.b16 %v502
        %v854 = vunpack.c.h.b16 %v502
        %v855 = vunpack.c.l.b16 %v503
        %v856 = vunpack.c.h.b16 %v503
        %v857 = vunpack.c.l.b16 %v504
        %v858 = vunpack.c.h.b16 %v504
        %v859 = vunpack.c.l.b16 %v505
        %v860 = vunpack.c.h.b16 %v505
        %v861 = vunpack.c.l.b16 %v506
        %v862 = vunpack.c.h.b16 %v506
        %v863 = vunpack.c.l.b16 %v507
        %v864 = vunpack.c.h.b16 %v507
        %v865 = vunpack.c.l.b16 %v508
        %v866 = vunpack.c.h.b16 %v508
        %v867 = vunpack.c.l.b16 %v509
        %v868 = vunpack.c.h.b16 %v509
        %v869 = vunpack.c.l.b16 %v510
        %v870 = vunpack.c.h.b16 %v510
        %v871 = vunpack.c.l.b16 %v511
        %v872 = vunpack.c.h.b16 %v511
        %v873 = vunpack.c.l.b16 %v512
        %v874 = vunpack.c.h.b16 %v512
        %v875 = vunpack.c.l.b16 %v513
        %v876 = vunpack.c.h.b16 %v513
        %v877 = vunpack.c.l.b16 %v514
        %v878 = vunpack.c.h.b16 %v514
        %v879 = vunpack.c.l.b16 %v515
        %v880 = vunpack.c.h.b16 %v515
        %v881 = vunpack.c.l.b16 %v516
        %v882 = vunpack.c.h.b16 %v516
        %v883 = vunpack.c.l.b16 %v517
        %v884 = vunpack.c.h.b16 %v517
        %v885 = vunpack.c.l.b16 %v518
        %v886 = vunpack.c.h.b16 %v518
        %v887 = vunpack.c.l.b16 %v519
        %v888 = vunpack.c.h.b16 %v519
        %v889 = vunpack.c.l.b16 %v520
        %v890 = vunpack.c.h.b16 %v520
        %v891 = vunpack.c.l.b16 %v521
        %v892 = vunpack.c.h.b16 %v521
        %v893 = vunpack.c.l.b16 %v522
        %v894 = vunpack.c.h.b16 %v522
        %v895 = vunpack.c.l.b16 %v523
        %v896 = vunpack.c.h.b16 %v523
        %v897 = vunpack.c.l.b16 %v524
        %v898 = vunpack.c.h.b16 %v524
        %v899 = vunpack.c.l.b16 %v525
        %v900 = vunpack.c.h.b16 %v525
        %v901 = vunpack.c.l.b16 %v526
        %v902 = vunpack.c.h.b16 %v526
        %v903 = vunpack.c.l.b16 %v527
        %v904 = vunpack.c.h.b16 %v527
        %v905 = vunpack.c.l.b16 %v528
        %v906 = vunpack.c.h.b16 %v528
        %v907 = vunpack.c.l.b16 %v529
        %v908 = vunpack.c.h.b16 %v529
        %v909 = vunpack.c.l.b16 %v530
        %v910 = vunpack.c.h.b16 %v530
        %v911 = vunpack.c.l.b16 %v531
        %v912 = vunpack.c.h.b16 %v531
        %v913 = vunpack.c.l.b16 %v532
        %v914 = vunpack.c.h.b16 %v532
        %v915 = vunpack.c.l.b16 %v533
        %v916 = vunpack.c.h.b16 %v533
        %v917 = vunpack.c.l.b16 %v534
        %v918 = vunpack.c.h.b16 %v534
        %v919 = vunpack.c.l.b16 %v535
        %v920 = vunpack.c.h.b16 %v535
        %v921 = vunpack.c.l.b16 %v536
        %v922 = vunpack.c.h.b16 %v536
        %v923 = vunpack.c.l.b16 %v537
        %v924 = vunpack.c.h.b16 %v537
        %v925 = vunpack.c.l.b16 %v538
        %v926 = vunpack.c.h.b16 %v538
        %v927 = vunpack.c.l.b16 %v539
        %v928 = vunpack.c.h.b16 %v539
        %v929 = vunpack.c.l.b16 %v540
        %v930 = vunpack.c.h.b16 %v540
        %v931 = vunpack.c.l.b16 %v541
        %v932 = vunpack.c.h.b16 %v541
        %v933 = vunpack.c.l.b16 %v542
        %v934 = vunpack.c.h.b16 %v542
        %v935 = vunpack.c.l.b16 %v543
        %v936 = vunpack.c.h.b16 %v543
        %v937 = vunpack.c.l.b16 %v544
        %v938 = vunpack.c.h.b16 %v544
        %v939 = vunpack.c.l.b16 %v545
        %v940 = vunpack.c.h.b16 %v545
        %v941 = vunpack.c.l.b16 %v546
        %v942 = vunpack.c.h.b16 %v546
        %v943 = vunpack.c.l.b16 %v547
        %v944 = vunpack.c.h.b16 %v547
        %v945 = vunpack.c.l.b16 %v548
        %v946 = vunpack.c.h.b16 %v548
        %v947 = vunpack.c.l.b16 %v549
        %v948 = vunpack.c.h.b16 %v549
        %v949 = vunpack.c.l.b16 %v550
        %v950 = vunpack.c.h.b16 %v550
        %v951 = vunpack.c.l.b16 %v551
        %v952 = vunpack.c.h.b16 %v551
        %v953 = vunpack.c.l.b16 %v552
        %v954 = vunpack.c.h.b16 %v552
        %v955 = vunpack.c.l.b16 %v553
        %v956 = vunpack.c.h.b16 %v553
        %v957 = vunpack.c.l.b16 %v554
        %v958 = vunpack.c.h.b16 %v554
        %v959 = vunpack.c.l.b16 %v555
        %v960 = vunpack.c.h.b16 %v555
        %v961 = vunpack.c.l.b16 %v556
        %v962 = vunpack.c.h.b16 %v556
        %v963 = vunpack.c.l.b16 %v557
        %v964 = vunpack.c.h.b16 %v557
        %v965 = vunpack.c.l.b16 %v558
        %v966 = vunpack.c.h.b16 %v558
        %v967 = vunpack.c.l.b16 %v559
        %v968 = vunpack.c.h.b16 %v559
        %v969 = vunpack.c.l.b16 %v560
        %v970 = vunpack.c.h.b16 %v560
        %v971 = vunpack.c.l.b16 %v561
        %v972 = vunpack.c.h.b16 %v561
        %v973 = vunpack.c.l.b16 %v562
        %v974 = vunpack.c.h.b16 %v562
        %v975 = vunpack.c.l.b16 %v563
        %v976 = vunpack.c.h.b16 %v563
        %v977 = vunpack.c.l.b16 %v564
        %v978 = vunpack.c.h.b16 %v564
        %v979 = vunpack.c.l.b16 %v565
        %v980 = vunpack.c.h.b16 %v565
        %v981 = vunpack.c.l.b16 %v566
        %v982 = vunpack.c.h.b16 %v566
        %v983 = vunpack.c.l.b16 %v567
        %v984 = vunpack.c.h.b16 %v567
        %v985 = vunpack.c.l.b16 %v568
        %v986 = vunpack.c.h.b16 %v568
        %v987 = vpack.c.b16 %v733, %v731
        %v988 = vpack.c.b16 %v734, %v732
        %v989 = vpack.c.b16 %v737, %v735
        %v990 = vpack.c.b16 %v738, %v736
        %v991 = vpack.c.b16 %v741, %v739
        %v992 = vpack.c.b16 %v742, %v740
        %v993 = vpack.c.b16 %v745, %v743
        %v994 = vpack.c.b16 %v746, %v744
        %v995 = vpack.c.b16 %v749, %v747
        %v996 = vpack.c.b16 %v750, %v748
        %v997 = vpack.c.b16 %v753, %v751
        %v998 = vpack.c.b16 %v754, %v752
        %v999 = vpack.c.b16 %v757, %v755
        %v1000 = vpack.c.b16 %v758, %v756
        %v1001 = vpack.c.b16 %v761, %v759
        %v1002 = vpack.c.b16 %v762, %v760
        %v1003 = vpack.c.b16 %v765, %v763
        %v1004 = vpack.c.b16 %v766, %v764
        %v1005 = vpack.c.b16 %v769, %v767
        %v1006 = vpack.c.b16 %v770, %v768
        %v1007 = vpack.c.b16 %v773, %v771
        %v1008 = vpack.c.b16 %v774, %v772
        %v1009 = vpack.c.b16 %v777, %v775
        %v1010 = vpack.c.b16 %v778, %v776
        %v1011 = vpack.c.b16 %v781, %v779
        %v1012 = vpack.c.b16 %v782, %v780
        %v1013 = vpack.c.b16 %v785, %v783
        %v1014 = vpack.c.b16 %v786, %v784
        %v1015 = vpack.c.b16 %v789, %v787
        %v1016 = vpack.c.b16 %v790, %v788
        %v1017 = vpack.c.b16 %v793, %v791
        %v1018 = vpack.c.b16 %v794, %v792
        %v1019 = vpack.c.b16 %v797, %v795
        %v1020 = vpack.c.b16 %v798, %v796
        %v1021 = vpack.c.b16 %v801, %v799
        %v1022 = vpack.c.b16 %v802, %v800
        %v1023 = vpack.c.b16 %v805, %v803
        %v1024 = vpack.c.b16 %v806, %v804
        %v1025 = vpack.c.b16 %v809, %v807
        %v1026 = vpack.c.b16 %v810, %v808
        %v1027 = vpack.c.b16 %v813, %v811
        %v1028 = vpack.c.b16 %v814, %v812
        %v1029 = vpack.c.b16 %v817, %v815
        %v1030 = vpack.c.b16 %v818, %v816
        %v1031 = vpack.c.b16 %v821, %v819
        %v1032 = vpack.c.b16 %v822, %v820
        %v1033 = vpack.c.b16 %v825, %v823
        %v1034 = vpack.c.b16 %v826, %v824
        %v1035 = vpack.c.b16 %v829, %v827
        %v1036 = vpack.c.b16 %v830, %v828
        %v1037 = vpack.c.b16 %v833, %v831
        %v1038 = vpack.c.b16 %v834, %v832
        %v1039 = vpack.c.b16 %v837, %v835
        %v1040 = vpack.c.b16 %v838, %v836
        %v1041 = vpack.c.b16 %v841, %v839
        %v1042 = vpack.c.b16 %v842, %v840
        %v1043 = vpack.c.b16 %v845, %v843
        %v1044 = vpack.c.b16 %v846, %v844
        %v1045 = vpack.c.b16 %v849, %v847
        %v1046 = vpack.c.b16 %v850, %v848
        %v1047 = vpack.c.b16 %v853, %v851
        %v1048 = vpack.c.b16 %v854, %v852
        %v1049 = vpack.c.b16 %v857, %v855
        %v1050 = vpack.c.b16 %v858, %v856
        %v1051 = vpack.c.b16 %v861, %v859
        %v1052 = vpack.c.b16 %v862, %v860
        %v1053 = vpack.c.b16 %v865, %v863
        %v1054 = vpack.c.b16 %v866, %v864
        %v1055 = vpack.c.b16 %v869, %v867
        %v1056 = vpack.c.b16 %v870, %v868
        %v1057 = vpack.c.b16 %v873, %v871
        %v1058 = vpack.c.b16 %v874, %v872
        %v1059 = vpack.c.b16 %v877, %v875
        %v1060 = vpack.c.b16 %v878, %v876
        %v1061 = vpack.c.b16 %v881, %v879
        %v1062 = vpack.c.b16 %v882, %v880
        %v1063 = vpack.c.b16 %v885, %v883
        %v1064 = vpack.c.b16 %v886, %v884
        %v1065 = vpack.c.b16 %v889, %v887
        %v1066 = vpack.c.b16 %v890, %v888
        %v1067 = vpack.c.b16 %v893, %v891
        %v1068 = vpack.c.b16 %v894, %v892
        %v1069 = vpack.c.b16 %v897, %v895
        %v1070 = vpack.c.b16 %v898, %v896
        %v1071 = vpack.c.b16 %v901, %v899
        %v1072 = vpack.c.b16 %v902, %v900
        %v1073 = vpack.c.b16 %v905, %v903
        %v1074 = vpack.c.b16 %v906, %v904
        %v1075 = vpack.c.b16 %v909, %v907
        %v1076 = vpack.c.b16 %v910, %v908
        %v1077 = vpack.c.b16 %v913, %v911
        %v1078 = vpack.c.b16 %v914, %v912
        %v1079 = vpack.c.b16 %v917, %v915
        %v1080 = vpack.c.b16 %v918, %v916
        %v1081 = vpack.c.b16 %v921, %v919
        %v1082 = vpack.c.b16 %v922, %v920
        %v1083 = vpack.c.b16 %v925, %v923
        %v1084 = vpack.c.b16 %v926, %v924
        %v1085 = vpack.c.b16 %v929, %v927
        %v1086 = vpack.c.b16 %v930, %v928
        %v1087 = vpack.c.b16 %v933, %v931
        %v1088 = vpack.c.b16 %v934, %v932
        %v1089 = vpack.c.b16 %v937, %v935
        %v1090 = vpack.c.b16 %v938, %v936
        %v1091 = vpack.c.b16 %v941, %v939
        %v1092 = vpack.c.b16 %v942, %v940
        %v1093 = vpack.c.b16 %v945, %v943
        %v1094 = vpack.c.b16 %v946, %v944
        %v1095 = vpack.c.b16 %v949, %v947
        %v1096 = vpack.c.b16 %v950, %v948
        %v1097 = vpack.c.b16 %v953, %v951
        %v1098 = vpack.c.b16 %v954, %v952
        %v1099 = vpack.c.b16 %v957, %v955
        %v1100 = vpack.c.b16 %v958, %v956
        %v1101 = vpack.c.b16 %v961, %v959
        %v1102 = vpack.c.b16 %v962, %v960
        %v1103 = vpack.c.b16 %v965, %v963
        %v1104 = vpack.c.b16 %v966, %v964
        %v1105 = vpack.c.b16 %v969, %v967
        %v1106 = vpack.c.b16 %v970, %v968
        %v1107 = vpack.c.b16 %v973, %v971
        %v1108 = vpack.c.b16 %v974, %v972
        %v1109 = vpack.c.b16 %v977, %v975
        %v1110 = vpack.c.b16 %v978, %v976
        %v1111 = vpack.c.b16 %v981, %v979
        %v1112 = vpack.c.b16 %v982, %v980
        %v1113 = vpack.c.b16 %v985, %v983
        %v1114 = vpack.c.b16 %v986, %v984
        %1243 = vmatpush.bf16.msra.mxu0 %v1001
        %1244 = vmatpush.bf16.msra.mxu0 %v999
        %1245 = vmatpush.bf16.msra.mxu0 %v997
        %1246 = vmatpush.bf16.msra.mxu0 %v995
        %1247 = vmatpush.bf16.msra.mxu0 %v993
        %1248 = vmatpush.bf16.msra.mxu0 %v991
        %1249 = vmatpush.bf16.msra.mxu0 %v989
        %1250 = vmatpush.bf16.msra.mxu0 %v987
        %1251 = vmatmul.bf16.gmra.mxu0 %v587
        %v1252 = vpop.f32.mrf.mxu0
        %v1253 = vadd.f32 %v571, %v1252
        %v1254 = vpop.f32.mrf.mxu0
        %1255 = vdwg.mxu0
        %1256 = vmatpush.bf16.msra.mxu0 %v1017
        %1257 = vmatpush.bf16.msra.mxu0 %v1015
        %1258 = vmatpush.bf16.msra.mxu0 %v1013
        %1259 = vmatpush.bf16.msra.mxu0 %v1011
        %1260 = vmatpush.bf16.msra.mxu0 %v1009
        %1261 = vmatpush.bf16.msra.mxu0 %v1007
        %1262 = vmatpush.bf16.msra.mxu0 %v1005
        %1263 = vmatpush.bf16.msra.mxu0 %v1003
        %1264 = vmatmul.bf16.gmra.mxu0 %v588
        %v1265 = vpop.f32.mrf.mxu0
        %v1266 = vadd.f32 %v1253, %v1265
        %v1267 = vpop.f32.mrf.mxu0
        %1268 = vdwg.mxu0
        %1269 = vmatpush.bf16.msra.mxu0 %v1033
        %1270 = vmatpush.bf16.msra.mxu0 %v1031
        %1271 = vmatpush.bf16.msra.mxu0 %v1029
        %1272 = vmatpush.bf16.msra.mxu0 %v1027
        %1273 = vmatpush.bf16.msra.mxu0 %v1025
        %1274 = vmatpush.bf16.msra.mxu0 %v1023
        %1275 = vmatpush.bf16.msra.mxu0 %v1021
        %1276 = vmatpush.bf16.msra.mxu0 %v1019
        %1277 = vmatmul.bf16.gmra.mxu0 %v589
        %v1278 = vpop.f32.mrf.mxu0
        %v1279 = vadd.f32 %v1266, %v1278
        %v1280 = vpop.f32.mrf.mxu0
        %1281 = vdwg.mxu0
        %1282 = vmatpush.bf16.msra.mxu0 %v1049
        %1283 = vmatpush.bf16.msra.mxu0 %v1047
        %1284 = vmatpush.bf16.msra.mxu0 %v1045
        %1285 = vmatpush.bf16.msra.mxu0 %v1043
        %1286 = vmatpush.bf16.msra.mxu0 %v1041
        %1287 = vmatpush.bf16.msra.mxu0 %v1039
        %1288 = vmatpush.bf16.msra.mxu0 %v1037
        %1289 = vmatpush.bf16.msra.mxu0 %v1035
        %1290 = vmatmul.bf16.gmra.mxu0 %v590
        %v1291 = vpop.f32.mrf.mxu0
        %v1292 = vadd.f32 %v1279, %v1291
        %v1293 = vpop.f32.mrf.mxu0
        %1294 = vdwg.mxu0
        %1295 = vmatpush.bf16.msra.mxu0 %v1065
        %1296 = vmatpush.bf16.msra.mxu0 %v1063
        %1297 = vmatpush.bf16.msra.mxu0 %v1061
        %1298 = vmatpush.bf16.msra.mxu0 %v1059
        %1299 = vmatpush.bf16.msra.mxu0 %v1057
        %1300 = vmatpush.bf16.msra.mxu0 %v1055
        %1301 = vmatpush.bf16.msra.mxu0 %v1053
        %1302 = vmatpush.bf16.msra.mxu0 %v1051
        %1303 = vmatmul.bf16.gmra.mxu0 %v591
        %v1304 = vpop.f32.mrf.mxu0
        %v1305 = vadd.f32 %v1292, %v1304
        %v1306 = vpop.f32.mrf.mxu0
        %1307 = vdwg.mxu0
        %1308 = vmatpush.bf16.msra.mxu0 %v1081
        %1309 = vmatpush.bf16.msra.mxu0 %v1079
        %1310 = vmatpush.bf16.msra.mxu0 %v1077
        %1311 = vmatpush.bf16.msra.mxu0 %v1075
        %1312 = vmatpush.bf16.msra.mxu0 %v1073
        %1313 = vmatpush.bf16.msra.mxu0 %v1071
        %1314 = vmatpush.bf16.msra.mxu0 %v1069
        %1315 = vmatpush.bf16.msra.mxu0 %v1067
        %1316 = vmatmul.bf16.gmra.mxu0 %v592
        %v1317 = vpop.f32.mrf.mxu0
        %v1318 = vadd.f32 %v1305, %v1317
        %v1319 = vpop.f32.mrf.mxu0
        %1320 = vdwg.mxu0
        %1321 = vmatpush.bf16.msra.mxu0 %v1097
        %1322 = vmatpush.bf16.msra.mxu0 %v1095
        %1323 = vmatpush.bf16.msra.mxu0 %v1093
        %1324 = vmatpush.bf16.msra.mxu0 %v1091
        %1325 = vmatpush.bf16.msra.mxu0 %v1089
        %1326 = vmatpush.bf16.msra.mxu0 %v1087
        %1327 = vmatpush.bf16.msra.mxu0 %v1085
        %1328 = vmatpush.bf16.msra.mxu0 %v1083
        %1329 = vmatmul.bf16.gmra.mxu0 %v593
        %v1330 = vpop.f32.mrf.mxu0
        %v1331 = vadd.f32 %v1318, %v1330
        %v1332 = vpop.f32.mrf.mxu0
        %1333 = vdwg.mxu0
        %1334 = vmatpush.bf16.msra.mxu0 %v1113
        %1335 = vmatpush.bf16.msra.mxu0 %v1111
        %1336 = vmatpush.bf16.msra.mxu0 %v1109
        %1337 = vmatpush.bf16.msra.mxu0 %v1107
        %1338 = vmatpush.bf16.msra.mxu0 %v1105
        %1339 = vmatpush.bf16.msra.mxu0 %v1103
        %1340 = vmatpush.bf16.msra.mxu0 %v1101
        %1341 = vmatpush.bf16.msra.mxu0 %v1099
        %1342 = vmatmul.bf16.gmra.mxu0 %v594
        %v1343 = vpop.f32.mrf.mxu0
        %v1344 = vadd.f32 %v1331, %v1343
        %v1345 = vpop.f32.mrf.mxu0
        %1346 = vdwg.mxu0
        %1347 = vmatpush.bf16.msra.mxu0 %v1002
        %1348 = vmatpush.bf16.msra.mxu0 %v1000
        %1349 = vmatpush.bf16.msra.mxu0 %v998
        %1350 = vmatpush.bf16.msra.mxu0 %v996
        %1351 = vmatpush.bf16.msra.mxu0 %v994
        %1352 = vmatpush.bf16.msra.mxu0 %v992
        %1353 = vmatpush.bf16.msra.mxu0 %v990
        %1354 = vmatpush.bf16.msra.mxu0 %v988
        %1355 = vmatmul.bf16.gmra.mxu0 %v587
        %v1356 = vpop.f32.mrf.mxu0
        %v1357 = vadd.f32 %v572, %v1356
        %v1358 = vpop.f32.mrf.mxu0
        %1359 = vdwg.mxu0
        %1360 = vmatpush.bf16.msra.mxu0 %v1018
        %1361 = vmatpush.bf16.msra.mxu0 %v1016
        %1362 = vmatpush.bf16.msra.mxu0 %v1014
        %1363 = vmatpush.bf16.msra.mxu0 %v1012
        %1364 = vmatpush.bf16.msra.mxu0 %v1010
        %1365 = vmatpush.bf16.msra.mxu0 %v1008
        %1366 = vmatpush.bf16.msra.mxu0 %v1006
        %1367 = vmatpush.bf16.msra.mxu0 %v1004
        %1368 = vmatmul.bf16.gmra.mxu0 %v588
        %v1369 = vpop.f32.mrf.mxu0
        %v1370 = vadd.f32 %v1357, %v1369
        %v1371 = vpop.f32.mrf.mxu0
        %1372 = vdwg.mxu0
        %1373 = vmatpush.bf16.msra.mxu0 %v1034
        %1374 = vmatpush.bf16.msra.mxu0 %v1032
        %1375 = vmatpush.bf16.msra.mxu0 %v1030
        %1376 = vmatpush.bf16.msra.mxu0 %v1028
        %1377 = vmatpush.bf16.msra.mxu0 %v1026
        %1378 = vmatpush.bf16.msra.mxu0 %v1024
        %1379 = vmatpush.bf16.msra.mxu0 %v1022
        %1380 = vmatpush.bf16.msra.mxu0 %v1020
        %1381 = vmatmul.bf16.gmra.mxu0 %v589
        %v1382 = vpop.f32.mrf.mxu0
        %v1383 = vadd.f32 %v1370, %v1382
        %v1384 = vpop.f32.mrf.mxu0
        %1385 = vdwg.mxu0
        %1386 = vmatpush.bf16.msra.mxu0 %v1050
        %1387 = vmatpush.bf16.msra.mxu0 %v1048
        %1388 = vmatpush.bf16.msra.mxu0 %v1046
        %1389 = vmatpush.bf16.msra.mxu0 %v1044
        %1390 = vmatpush.bf16.msra.mxu0 %v1042
        %1391 = vmatpush.bf16.msra.mxu0 %v1040
        %1392 = vmatpush.bf16.msra.mxu0 %v1038
        %1393 = vmatpush.bf16.msra.mxu0 %v1036
        %1394 = vmatmul.bf16.gmra.mxu0 %v590
        %v1395 = vpop.f32.mrf.mxu0
        %v1396 = vadd.f32 %v1383, %v1395
        %v1397 = vpop.f32.mrf.mxu0
        %1398 = vdwg.mxu0
        %1399 = vmatpush.bf16.msra.mxu0 %v1066
        %1400 = vmatpush.bf16.msra.mxu0 %v1064
        %1401 = vmatpush.bf16.msra.mxu0 %v1062
        %1402 = vmatpush.bf16.msra.mxu0 %v1060
        %1403 = vmatpush.bf16.msra.mxu0 %v1058
        %1404 = vmatpush.bf16.msra.mxu0 %v1056
        %1405 = vmatpush.bf16.msra.mxu0 %v1054
        %1406 = vmatpush.bf16.msra.mxu0 %v1052
        %1407 = vmatmul.bf16.gmra.mxu0 %v591
        %v1408 = vpop.f32.mrf.mxu0
        %v1409 = vadd.f32 %v1396, %v1408
        %v1410 = vpop.f32.mrf.mxu0
        %1411 = vdwg.mxu0
        %1412 = vmatpush.bf16.msra.mxu0 %v1082
        %1413 = vmatpush.bf16.msra.mxu0 %v1080
        %1414 = vmatpush.bf16.msra.mxu0 %v1078
        %1415 = vmatpush.bf16.msra.mxu0 %v1076
        %1416 = vmatpush.bf16.msra.mxu0 %v1074
        %1417 = vmatpush.bf16.msra.mxu0 %v1072
        %1418 = vmatpush.bf16.msra.mxu0 %v1070
        %1419 = vmatpush.bf16.msra.mxu0 %v1068
        %1420 = vmatmul.bf16.gmra.mxu0 %v592
        %v1421 = vpop.f32.mrf.mxu0
        %v1422 = vadd.f32 %v1409, %v1421
        %v1423 = vpop.f32.mrf.mxu0
        %1424 = vdwg.mxu0
        %1425 = vmatpush.bf16.msra.mxu0 %v1098
        %1426 = vmatpush.bf16.msra.mxu0 %v1096
        %1427 = vmatpush.bf16.msra.mxu0 %v1094
        %1428 = vmatpush.bf16.msra.mxu0 %v1092
        %1429 = vmatpush.bf16.msra.mxu0 %v1090
        %1430 = vmatpush.bf16.msra.mxu0 %v1088
        %1431 = vmatpush.bf16.msra.mxu0 %v1086
        %1432 = vmatpush.bf16.msra.mxu0 %v1084
        %1433 = vmatmul.bf16.gmra.mxu0 %v593
        %v1434 = vpop.f32.mrf.mxu0
        %v1435 = vadd.f32 %v1422, %v1434
        %v1436 = vpop.f32.mrf.mxu0
        %1437 = vdwg.mxu0
        %1438 = vmatpush.bf16.msra.mxu0 %v1114
        %1439 = vmatpush.bf16.msra.mxu0 %v1112
        %1440 = vmatpush.bf16.msra.mxu0 %v1110
        %1441 = vmatpush.bf16.msra.mxu0 %v1108
        %1442 = vmatpush.bf16.msra.mxu0 %v1106
        %1443 = vmatpush.bf16.msra.mxu0 %v1104
        %1444 = vmatpush.bf16.msra.mxu0 %v1102
        %1445 = vmatpush.bf16.msra.mxu0 %v1100
        %1446 = vmatmul.bf16.gmra.mxu0 %v594
        %v1447 = vpop.f32.mrf.mxu0
        %v1448 = vadd.f32 %v1435, %v1447
        %v1449 = vpop.f32.mrf.mxu0
        %1450 = vdwg.mxu0
        %v1451 = vmax.f32 %v1344, 0.0
        %v1452 = vmax.f32 %v1448, 0.0
        %v1453 = vld [vmem:[#allocation2] sm:$0xff]
        %v1454 = vld [vmem:[#allocation2 + $0x8] sm:$0xff]
        %v1455 = vld [vmem:[#allocation2 + $0x10] sm:$0xff]
        %v1456 = vld [vmem:[#allocation2 + $0x18] sm:$0xff]
        %v1457 = vpack.c.bf16 %v1451, %v1451
        %v1458 = vpack.c.bf16 %v1452, %v1452
        %v1459 = vld [vmem:[%s374] sm:$0xff]
        %v1460 = vld [vmem:[%s374 + $0x8] sm:$0xff]
        %v1461 = vld [vmem:[%s374 + $0x10] sm:$0xff]
        %v1462 = vld [vmem:[%s374 + $0x18] sm:$0xff]
        %v1463 = vld [vmem:[%s374 + $0x20] sm:$0xff]
        %v1464 = vld [vmem:[%s374 + $0x28] sm:$0xff]
        %v1465 = vld [vmem:[%s374 + $0x30] sm:$0xff]
        %v1466 = vld [vmem:[%s374 + $0x38] sm:$0xff]
        %v1467 = vld [vmem:[%s374 + $0x40] sm:$0xff]
        %v1468 = vld [vmem:[%s374 + $0x48] sm:$0xff]
        %v1469 = vld [vmem:[%s374 + $0x50] sm:$0xff]
        %v1470 = vld [vmem:[%s374 + $0x58] sm:$0xff]
        %v1471 = vld [vmem:[%s374 + $0x60] sm:$0xff]
        %v1472 = vld [vmem:[%s374 + $0x68] sm:$0xff]
        %v1473 = vld [vmem:[%s374 + $0x70] sm:$0xff]
        %v1474 = vld [vmem:[%s374 + $0x78] sm:$0xff]
        %v1475 = vld [vmem:[%s374 + $0x80] sm:$0xff]
        %v1476 = vld [vmem:[%s374 + $0x88] sm:$0xff]
        %v1477 = vld [vmem:[%s374 + $0x90] sm:$0xff]
        %v1478 = vld [vmem:[%s374 + $0x98] sm:$0xff]
        %v1479 = vld [vmem:[%s374 + $0xa0] sm:$0xff]
        %v1480 = vld [vmem:[%s374 + $0xa8] sm:$0xff]
        %v1481 = vld [vmem:[%s374 + $0xb0] sm:$0xff]
        %v1482 = vld [vmem:[%s374 + $0xb8] sm:$0xff]
        %v1483 = vld [vmem:[%s374 + $0xc0] sm:$0xff]
        %v1484 = vld [vmem:[%s374 + $0xc8] sm:$0xff]
        %v1485 = vld [vmem:[%s374 + $0xd0] sm:$0xff]
        %v1486 = vld [vmem:[%s374 + $0xd8] sm:$0xff]
        %v1487 = vld [vmem:[%s374 + $0xe0] sm:$0xff]
        %v1488 = vld [vmem:[%s374 + $0xe8] sm:$0xff]
        %v1489 = vld [vmem:[%s374 + $0xf0] sm:$0xff]
        %v1490 = vld [vmem:[%s374 + $0xf8] sm:$0xff]
        %v1491 = vld [vmem:[%s374 + $0x100] sm:$0xff]
        %v1492 = vld [vmem:[%s374 + $0x108] sm:$0xff]
        %v1493 = vld [vmem:[%s374 + $0x110] sm:$0xff]
        %v1494 = vld [vmem:[%s374 + $0x118] sm:$0xff]
        %v1495 = vld [vmem:[%s374 + $0x120] sm:$0xff]
        %v1496 = vld [vmem:[%s374 + $0x128] sm:$0xff]
        %v1497 = vld [vmem:[%s374 + $0x130] sm:$0xff]
        %v1498 = vld [vmem:[%s374 + $0x138] sm:$0xff]
        %v1499 = vld [vmem:[%s374 + $0x140] sm:$0xff]
        %v1500 = vld [vmem:[%s374 + $0x148] sm:$0xff]
        %v1501 = vld [vmem:[%s374 + $0x150] sm:$0xff]
        %v1502 = vld [vmem:[%s374 + $0x158] sm:$0xff]
        %v1503 = vld [vmem:[%s374 + $0x160] sm:$0xff]
        %v1504 = vld [vmem:[%s374 + $0x168] sm:$0xff]
        %v1505 = vld [vmem:[%s374 + $0x170] sm:$0xff]
        %v1506 = vld [vmem:[%s374 + $0x178] sm:$0xff]
        %v1507 = vld [vmem:[%s374 + $0x180] sm:$0xff]
        %v1508 = vld [vmem:[%s374 + $0x188] sm:$0xff]
        %v1509 = vld [vmem:[%s374 + $0x190] sm:$0xff]
        %v1510 = vld [vmem:[%s374 + $0x198] sm:$0xff]
        %v1511 = vld [vmem:[%s374 + $0x1a0] sm:$0xff]
        %v1512 = vld [vmem:[%s374 + $0x1a8] sm:$0xff]
        %v1513 = vld [vmem:[%s374 + $0x1b0] sm:$0xff]
        %v1514 = vld [vmem:[%s374 + $0x1b8] sm:$0xff]
        %v1515 = vld [vmem:[%s374 + $0x1c0] sm:$0xff]
        %v1516 = vld [vmem:[%s374 + $0x1c8] sm:$0xff]
        %v1517 = vld [vmem:[%s374 + $0x1d0] sm:$0xff]
        %v1518 = vld [vmem:[%s374 + $0x1d8] sm:$0xff]
        %v1519 = vld [vmem:[%s374 + $0x1e0] sm:$0xff]
        %v1520 = vld [vmem:[%s374 + $0x1e8] sm:$0xff]
        %v1521 = vld [vmem:[%s374 + $0x1f0] sm:$0xff]
        %v1522 = vld [vmem:[%s374 + $0x1f8] sm:$0xff]
        %v1587 = vunpack.c.l.b16 %v1459
        %v1588 = vunpack.c.h.b16 %v1459
        %v1589 = vunpack.c.l.b16 %v1460
        %v1590 = vunpack.c.h.b16 %v1460
        %v1591 = vunpack.c.l.b16 %v1461
        %v1592 = vunpack.c.h.b16 %v1461
        %v1593 = vunpack.c.l.b16 %v1462
        %v1594 = vunpack.c.h.b16 %v1462
        %v1595 = vunpack.c.l.b16 %v1463
        %v1596 = vunpack.c.h.b16 %v1463
        %v1597 = vunpack.c.l.b16 %v1464
        %v1598 = vunpack.c.h.b16 %v1464
        %v1599 = vunpack.c.l.b16 %v1465
        %v1600 = vunpack.c.h.b16 %v1465
        %v1601 = vunpack.c.l.b16 %v1466
        %v1602 = vunpack.c.h.b16 %v1466
        %v1603 = vunpack.c.l.b16 %v1467
        %v1604 = vunpack.c.h.b16 %v1467
        %v1605 = vunpack.c.l.b16 %v1468
        %v1606 = vunpack.c.h.b16 %v1468
        %v1607 = vunpack.c.l.b16 %v1469
        %v1608 = vunpack.c.h.b16 %v1469
        %v1609 = vunpack.c.l.b16 %v1470
        %v1610 = vunpack.c.h.b16 %v1470
        %v1611 = vunpack.c.l.b16 %v1471
        %v1612 = vunpack.c.h.b16 %v1471
        %v1613 = vunpack.c.l.b16 %v1472
        %v1614 = vunpack.c.h.b16 %v1472
        %v1615 = vunpack.c.l.b16 %v1473
        %v1616 = vunpack.c.h.b16 %v1473
        %v1617 = vunpack.c.l.b16 %v1474
        %v1618 = vunpack.c.h.b16 %v1474
        %v1619 = vunpack.c.l.b16 %v1475
        %v1620 = vunpack.c.h.b16 %v1475
        %v1621 = vunpack.c.l.b16 %v1476
        %v1622 = vunpack.c.h.b16 %v1476
        %v1623 = vunpack.c.l.b16 %v1477
        %v1624 = vunpack.c.h.b16 %v1477
        %v1625 = vunpack.c.l.b16 %v1478
        %v1626 = vunpack.c.h.b16 %v1478
        %v1627 = vunpack.c.l.b16 %v1479
        %v1628 = vunpack.c.h.b16 %v1479
        %v1629 = vunpack.c.l.b16 %v1480
        %v1630 = vunpack.c.h.b16 %v1480
        %v1631 = vunpack.c.l.b16 %v1481
        %v1632 = vunpack.c.h.b16 %v1481
        %v1633 = vunpack.c.l.b16 %v1482
        %v1634 = vunpack.c.h.b16 %v1482
        %v1635 = vunpack.c.l.b16 %v1483
        %v1636 = vunpack.c.h.b16 %v1483
        %v1637 = vunpack.c.l.b16 %v1484
        %v1638 = vunpack.c.h.b16 %v1484
        %v1639 = vunpack.c.l.b16 %v1485
        %v1640 = vunpack.c.h.b16 %v1485
        %v1641 = vunpack.c.l.b16 %v1486
        %v1642 = vunpack.c.h.b16 %v1486
        %v1643 = vunpack.c.l.b16 %v1487
        %v1644 = vunpack.c.h.b16 %v1487
        %v1645 = vunpack.c.l.b16 %v1488
        %v1646 = vunpack.c.h.b16 %v1488
        %v1647 = vunpack.c.l.b16 %v1489
        %v1648 = vunpack.c.h.b16 %v1489
        %v1649 = vunpack.c.l.b16 %v1490
        %v1650 = vunpack.c.h.b16 %v1490
        %v1651 = vunpack.c.l.b16 %v1491
        %v1652 = vunpack.c.h.b16 %v1491
        %v1653 = vunpack.c.l.b16 %v1492
        %v1654 = vunpack.c.h.b16 %v1492
        %v1655 = vunpack.c.l.b16 %v1493
        %v1656 = vunpack.c.h.b16 %v1493
        %v1657 = vunpack.c.l.b16 %v1494
        %v1658 = vunpack.c.h.b16 %v1494
        %v1659 = vunpack.c.l.b16 %v1495
        %v1660 = vunpack.c.h.b16 %v1495
        %v1661 = vunpack.c.l.b16 %v1496
        %v1662 = vunpack.c.h.b16 %v1496
        %v1663 = vunpack.c.l.b16 %v1497
        %v1664 = vunpack.c.h.b16 %v1497
        %v1665 = vunpack.c.l.b16 %v1498
        %v1666 = vunpack.c.h.b16 %v1498
        %v1667 = vunpack.c.l.b16 %v1499
        %v1668 = vunpack.c.h.b16 %v1499
        %v1669 = vunpack.c.l.b16 %v1500
        %v1670 = vunpack.c.h.b16 %v1500
        %v1671 = vunpack.c.l.b16 %v1501
        %v1672 = vunpack.c.h.b16 %v1501
        %v1673 = vunpack.c.l.b16 %v1502
        %v1674 = vunpack.c.h.b16 %v1502
        %v1675 = vunpack.c.l.b16 %v1503
        %v1676 = vunpack.c.h.b16 %v1503
        %v1677 = vunpack.c.l.b16 %v1504
        %v1678 = vunpack.c.h.b16 %v1504
        %v1679 = vunpack.c.l.b16 %v1505
        %v1680 = vunpack.c.h.b16 %v1505
        %v1681 = vunpack.c.l.b16 %v1506
        %v1682 = vunpack.c.h.b16 %v1506
        %v1683 = vunpack.c.l.b16 %v1507
        %v1684 = vunpack.c.h.b16 %v1507
        %v1685 = vunpack.c.l.b16 %v1508
        %v1686 = vunpack.c.h.b16 %v1508
        %v1687 = vunpack.c.l.b16 %v1509
        %v1688 = vunpack.c.h.b16 %v1509
        %v1689 = vunpack.c.l.b16 %v1510
        %v1690 = vunpack.c.h.b16 %v1510
        %v1691 = vunpack.c.l.b16 %v1511
        %v1692 = vunpack.c.h.b16 %v1511
        %v1693 = vunpack.c.l.b16 %v1512
        %v1694 = vunpack.c.h.b16 %v1512
        %v1695 = vunpack.c.l.b16 %v1513
        %v1696 = vunpack.c.h.b16 %v1513
        %v1697 = vunpack.c.l.b16 %v1514
        %v1698 = vunpack.c.h.b16 %v1514
        %v1699 = vunpack.c.l.b16 %v1515
        %v1700 = vunpack.c.h.b16 %v1515
        %v1701 = vunpack.c.l.b16 %v1516
        %v1702 = vunpack.c.h.b16 %v1516
        %v1703 = vunpack.c.l.b16 %v1517
        %v1704 = vunpack.c.h.b16 %v1517
        %v1705 = vunpack.c.l.b16 %v1518
        %v1706 = vunpack.c.h.b16 %v1518
        %v1707 = vunpack.c.l.b16 %v1519
        %v1708 = vunpack.c.h.b16 %v1519
        %v1709 = vunpack.c.l.b16 %v1520
        %v1710 = vunpack.c.h.b16 %v1520
        %v1711 = vunpack.c.l.b16 %v1521
        %v1712 = vunpack.c.h.b16 %v1521
        %v1713 = vunpack.c.l.b16 %v1522
        %v1714 = vunpack.c.h.b16 %v1522
        %v1715 = vpack.c.b16 %v1591, %v1587
        %v1716 = vpack.c.b16 %v1592, %v1588
        %v1717 = vpack.c.b16 %v1593, %v1589
        %v1718 = vpack.c.b16 %v1594, %v1590
        %v1719 = vpack.c.b16 %v1599, %v1595
        %v1720 = vpack.c.b16 %v1600, %v1596
        %v1721 = vpack.c.b16 %v1601, %v1597
        %v1722 = vpack.c.b16 %v1602, %v1598
        %v1723 = vpack.c.b16 %v1607, %v1603
        %v1724 = vpack.c.b16 %v1608, %v1604
        %v1725 = vpack.c.b16 %v1609, %v1605
        %v1726 = vpack.c.b16 %v1610, %v1606
        %v1727 = vpack.c.b16 %v1615, %v1611
        %v1728 = vpack.c.b16 %v1616, %v1612
        %v1729 = vpack.c.b16 %v1617, %v1613
        %v1730 = vpack.c.b16 %v1618, %v1614
        %v1731 = vpack.c.b16 %v1623, %v1619
        %v1732 = vpack.c.b16 %v1624, %v1620
        %v1733 = vpack.c.b16 %v1625, %v1621
        %v1734 = vpack.c.b16 %v1626, %v1622
        %v1735 = vpack.c.b16 %v1631, %v1627
        %v1736 = vpack.c.b16 %v1632, %v1628
        %v1737 = vpack.c.b16 %v1633, %v1629
        %v1738 = vpack.c.b16 %v1634, %v1630
        %v1739 = vpack.c.b16 %v1639, %v1635
        %v1740 = vpack.c.b16 %v1640, %v1636
        %v1741 = vpack.c.b16 %v1641, %v1637
        %v1742 = vpack.c.b16 %v1642, %v1638
        %v1743 = vpack.c.b16 %v1647, %v1643
        %v1744 = vpack.c.b16 %v1648, %v1644
        %v1745 = vpack.c.b16 %v1649, %v1645
        %v1746 = vpack.c.b16 %v1650, %v1646
        %v1747 = vpack.c.b16 %v1655, %v1651
        %v1748 = vpack.c.b16 %v1656, %v1652
        %v1749 = vpack.c.b16 %v1657, %v1653
        %v1750 = vpack.c.b16 %v1658, %v1654
        %v1751 = vpack.c.b16 %v1663, %v1659
        %v1752 = vpack.c.b16 %v1664, %v1660
        %v1753 = vpack.c.b16 %v1665, %v1661
        %v1754 = vpack.c.b16 %v1666, %v1662
        %v1755 = vpack.c.b16 %v1671, %v1667
        %v1756 = vpack.c.b16 %v1672, %v1668
        %v1757 = vpack.c.b16 %v1673, %v1669
        %v1758 = vpack.c.b16 %v1674, %v1670
        %v1759 = vpack.c.b16 %v1679, %v1675
        %v1760 = vpack.c.b16 %v1680, %v1676
        %v1761 = vpack.c.b16 %v1681, %v1677
        %v1762 = vpack.c.b16 %v1682, %v1678
        %v1763 = vpack.c.b16 %v1687, %v1683
        %v1764 = vpack.c.b16 %v1688, %v1684
        %v1765 = vpack.c.b16 %v1689, %v1685
        %v1766 = vpack.c.b16 %v1690, %v1686
        %v1767 = vpack.c.b16 %v1695, %v1691
        %v1768 = vpack.c.b16 %v1696, %v1692
        %v1769 = vpack.c.b16 %v1697, %v1693
        %v1770 = vpack.c.b16 %v1698, %v1694
        %v1771 = vpack.c.b16 %v1703, %v1699
        %v1772 = vpack.c.b16 %v1704, %v1700
        %v1773 = vpack.c.b16 %v1705, %v1701
        %v1774 = vpack.c.b16 %v1706, %v1702
        %v1775 = vpack.c.b16 %v1711, %v1707
        %v1776 = vpack.c.b16 %v1712, %v1708
        %v1777 = vpack.c.b16 %v1713, %v1709
        %v1778 = vpack.c.b16 %v1714, %v1710
        %1843 = vmatpush.bf16.msra.mxu0 %v1743
        %1844 = vmatpush.bf16.msra.mxu0 %v1739
        %1845 = vmatpush.bf16.msra.mxu0 %v1735
        %1846 = vmatpush.bf16.msra.mxu0 %v1731
        %1847 = vmatpush.bf16.msra.mxu0 %v1727
        %1848 = vmatpush.bf16.msra.mxu0 %v1723
        %1849 = vmatpush.bf16.msra.mxu0 %v1719
        %1850 = vmatpush.bf16.msra.mxu0 %v1715
        %1851 = vmatmul.bf16.gmra.mxu0 %v1457
        %v1852 = vpop.f32.mrf.mxu0
        %v1853 = vadd.f32 0.0, %v1852
        %v1854 = vpop.f32.mrf.mxu0
        %1855 = vdwg.mxu0
        %1856 = vmatpush.bf16.msra.mxu0 %v1775
        %1857 = vmatpush.bf16.msra.mxu0 %v1771
        %1858 = vmatpush.bf16.msra.mxu0 %v1767
        %1859 = vmatpush.bf16.msra.mxu0 %v1763
        %1860 = vmatpush.bf16.msra.mxu0 %v1759
        %1861 = vmatpush.bf16.msra.mxu0 %v1755
        %1862 = vmatpush.bf16.msra.mxu0 %v1751
        %1863 = vmatpush.bf16.msra.mxu0 %v1747
        %1864 = vmatmul.bf16.gmra.mxu0 %v1458
        %v1865 = vpop.f32.mrf.mxu0
        %v1866 = vadd.f32 %v1853, %v1865
        %v1867 = vpop.f32.mrf.mxu0
        %1868 = vdwg.mxu0
        %1869 = vmatpush.bf16.msra.mxu0 %v1744
        %1870 = vmatpush.bf16.msra.mxu0 %v1740
        %1871 = vmatpush.bf16.msra.mxu0 %v1736
        %1872 = vmatpush.bf16.msra.mxu0 %v1732
        %1873 = vmatpush.bf16.msra.mxu0 %v1728
        %1874 = vmatpush.bf16.msra.mxu0 %v1724
        %1875 = vmatpush.bf16.msra.mxu0 %v1720
        %1876 = vmatpush.bf16.msra.mxu0 %v1716
        %1877 = vmatmul.bf16.gmra.mxu0 %v1457
        %v1878 = vpop.f32.mrf.mxu0
        %v1879 = vadd.f32 0.0, %v1878
        %v1880 = vpop.f32.mrf.mxu0
        %1881 = vdwg.mxu0
        %1882 = vmatpush.bf16.msra.mxu0 %v1776
        %1883 = vmatpush.bf16.msra.mxu0 %v1772
        %1884 = vmatpush.bf16.msra.mxu0 %v1768
        %1885 = vmatpush.bf16.msra.mxu0 %v1764
        %1886 = vmatpush.bf16.msra.mxu0 %v1760
        %1887 = vmatpush.bf16.msra.mxu0 %v1756
        %1888 = vmatpush.bf16.msra.mxu0 %v1752
        %1889 = vmatpush.bf16.msra.mxu0 %v1748
        %1890 = vmatmul.bf16.gmra.mxu0 %v1458
        %v1891 = vpop.f32.mrf.mxu0
        %v1892 = vadd.f32 %v1879, %v1891
        %v1893 = vpop.f32.mrf.mxu0
        %1894 = vdwg.mxu0
        %1895 = vmatpush.bf16.msra.mxu0 %v1745
        %1896 = vmatpush.bf16.msra.mxu0 %v1741
        %1897 = vmatpush.bf16.msra.mxu0 %v1737
        %1898 = vmatpush.bf16.msra.mxu0 %v1733
        %1899 = vmatpush.bf16.msra.mxu0 %v1729
        %1900 = vmatpush.bf16.msra.mxu0 %v1725
        %1901 = vmatpush.bf16.msra.mxu0 %v1721
        %1902 = vmatpush.bf16.msra.mxu0 %v1717
        %1903 = vmatmul.bf16.gmra.mxu0 %v1457
        %v1904 = vpop.f32.mrf.mxu0
        %v1905 = vadd.f32 0.0, %v1904
        %v1906 = vpop.f32.mrf.mxu0
        %1907 = vdwg.mxu0
        %1908 = vmatpush.bf16.msra.mxu0 %v1777
        %1909 = vmatpush.bf16.msra.mxu0 %v1773
        %1910 = vmatpush.bf16.msra.mxu0 %v1769
        %1911 = vmatpush.bf16.msra.mxu0 %v1765
        %1912 = vmatpush.bf16.msra.mxu0 %v1761
        %1913 = vmatpush.bf16.msra.mxu0 %v1757
        %1914 = vmatpush.bf16.msra.mxu0 %v1753
        %1915 = vmatpush.bf16.msra.mxu0 %v1749
        %1916 = vmatmul.bf16.gmra.mxu0 %v1458
        %v1917 = vpop.f32.mrf.mxu0
        %v1918 = vadd.f32 %v1905, %v1917
        %v1919 = vpop.f32.mrf.mxu0
        %1920 = vdwg.mxu0
        %1921 = vmatpush.bf16.msra.mxu0 %v1746
        %1922 = vmatpush.bf16.msra.mxu0 %v1742
        %1923 = vmatpush.bf16.msra.mxu0 %v1738
        %1924 = vmatpush.bf16.msra.mxu0 %v1734
        %1925 = vmatpush.bf16.msra.mxu0 %v1730
        %1926 = vmatpush.bf16.msra.mxu0 %v1726
        %1927 = vmatpush.bf16.msra.mxu0 %v1722
        %1928 = vmatpush.bf16.msra.mxu0 %v1718
        %1929 = vmatmul.bf16.gmra.mxu0 %v1457
        %v1930 = vpop.f32.mrf.mxu0
        %v1931 = vadd.f32 0.0, %v1930
        %v1932 = vpop.f32.mrf.mxu0
        %1933 = vdwg.mxu0
        %1934 = vmatpush.bf16.msra.mxu0 %v1778
        %1935 = vmatpush.bf16.msra.mxu0 %v1774
        %1936 = vmatpush.bf16.msra.mxu0 %v1770
        %1937 = vmatpush.bf16.msra.mxu0 %v1766
        %1938 = vmatpush.bf16.msra.mxu0 %v1762
        %1939 = vmatpush.bf16.msra.mxu0 %v1758
        %1940 = vmatpush.bf16.msra.mxu0 %v1754
        %1941 = vmatpush.bf16.msra.mxu0 %v1750
        %1942 = vmatmul.bf16.gmra.mxu0 %v1458
        %v1943 = vpop.f32.mrf.mxu0
        %v1944 = vadd.f32 %v1931, %v1943
        %v1945 = vpop.f32.mrf.mxu0
        %1946 = vdwg.mxu0
        %v1947 = vadd.f32 %v1453, %v1866
        %v1948 = vadd.f32 %v1454, %v1892
        %v1949 = vadd.f32 %v1455, %v1918
        %v1950 = vadd.f32 %v1456, %v1944
        %1951 = vst [vmem:[#allocation2] sm:$0xff] %v1947
        %1952 = vst [vmem:[#allocation2 + $0x8] sm:$0xff] %v1948
        %1953 = vst [vmem:[#allocation2 + $0x10] sm:$0xff] %v1949
        %1954 = vst [vmem:[#allocation2 + $0x18] sm:$0xff] %v1950
        %p1955 = scmp.eq.s32.totalorder %s27, 3
        // Predicated region
        $region81: #{tpu_custom_call.1} parent=47 // pred_check
          %p1956 = pneg %p1955
        $region82: #{tpu_custom_call.1} parent=47 // pred_check_branch
          %1958 = sbr.rel (%p1956) target = $region84
        $region83: #{tpu_custom_call.1} parent=47 // pred_region
          %v1959 = vld [vmem:[#allocation2] sm:$0xff]
          %v1960 = vld [vmem:[#allocation2 + $0x8] sm:$0xff]
          %v1961 = vld [vmem:[#allocation2 + $0x10] sm:$0xff]
          %v1962 = vld [vmem:[#allocation2 + $0x18] sm:$0xff]
          %v1963 = vld [vmem:[#allocation11] sm:$0xf]
          %v1965 = vperm.slane %v1963, 0
          %v1966 = vperm.slane %v1963, 1
          %v1967 = vperm.slane %v1963, 2
          %v1968 = vperm.slane %v1963, 3
          %v1973 = vadd.f32 %v1959, %v1965
          %v1974 = vadd.f32 %v1960, %v1966
          %v1975 = vadd.f32 %v1961, %v1967
          %v1976 = vadd.f32 %v1962, %v1968
          %v1977 = vmax.f32 %v1973, 0.0
          %v1978 = vmax.f32 %v1974, 0.0
          %v1979 = vmax.f32 %v1975, 0.0
          %v1980 = vmax.f32 %v1976, 0.0
          %v1981 = vpack.c.bf16 %v1977, %v1977
          %v1982 = vpack.c.bf16 %v1978, %v1978
          %v1983 = vpack.c.bf16 %v1979, %v1979
          %v1984 = vpack.c.bf16 %v1980, %v1980
          %v1985 = vld [vmem:[#allocation12] sm:$0xf]
          %v1986 = vld [vmem:[#allocation12 + $0x4] sm:$0xf]
          %v1987 = vld [vmem:[#allocation12 + $0x8] sm:$0xf]
          %v1988 = vld [vmem:[#allocation12 + $0xc] sm:$0xf]
          %v1989 = vld [vmem:[#allocation12 + $0x10] sm:$0xf]
          %v1990 = vld [vmem:[#allocation12 + $0x14] sm:$0xf]
          %v1991 = vld [vmem:[#allocation12 + $0x18] sm:$0xf]
          %v1992 = vld [vmem:[#allocation12 + $0x1c] sm:$0xf]
          %v1993 = vld [vmem:[#allocation12 + $0x20] sm:$0xf]
          %v1994 = vld [vmem:[#allocation12 + $0x24] sm:$0xf]
          %v1995 = vld [vmem:[#allocation12 + $0x28] sm:$0xf]
          %v1996 = vld [vmem:[#allocation12 + $0x2c] sm:$0xf]
          %v1997 = vld [vmem:[#allocation12 + $0x30] sm:$0xf]
          %v1998 = vld [vmem:[#allocation12 + $0x34] sm:$0xf]
          %v1999 = vld [vmem:[#allocation12 + $0x38] sm:$0xf]
          %v2000 = vld [vmem:[#allocation12 + $0x3c] sm:$0xf]
          %v2001 = vld [vmem:[#allocation12 + $0x40] sm:$0xf]
          %v2002 = vld [vmem:[#allocation12 + $0x44] sm:$0xf]
          %v2003 = vld [vmem:[#allocation12 + $0x48] sm:$0xf]
          %v2004 = vld [vmem:[#allocation12 + $0x4c] sm:$0xf]
          %v2005 = vld [vmem:[#allocation12 + $0x50] sm:$0xf]
          %v2006 = vld [vmem:[#allocation12 + $0x54] sm:$0xf]
          %v2007 = vld [vmem:[#allocation12 + $0x58] sm:$0xf]
          %v2008 = vld [vmem:[#allocation12 + $0x5c] sm:$0xf]
          %v2009 = vld [vmem:[#allocation12 + $0x60] sm:$0xf]
          %v2010 = vld [vmem:[#allocation12 + $0x64] sm:$0xf]
          %v2011 = vld [vmem:[#allocation12 + $0x68] sm:$0xf]
          %v2012 = vld [vmem:[#allocation12 + $0x6c] sm:$0xf]
          %v2013 = vld [vmem:[#allocation12 + $0x70] sm:$0xf]
          %v2014 = vld [vmem:[#allocation12 + $0x74] sm:$0xf]
          %v2015 = vld [vmem:[#allocation12 + $0x78] sm:$0xf]
          %v2016 = vld [vmem:[#allocation12 + $0x7c] sm:$0xf]
          %v2017 = vld [vmem:[#allocation12 + $0x80] sm:$0xf]
          %v2018 = vld [vmem:[#allocation12 + $0x84] sm:$0xf]
          %v2019 = vld [vmem:[#allocation12 + $0x88] sm:$0xf]
          %v2020 = vld [vmem:[#allocation12 + $0x8c] sm:$0xf]
          %v2021 = vld [vmem:[#allocation12 + $0x90] sm:$0xf]
          %v2022 = vld [vmem:[#allocation12 + $0x94] sm:$0xf]
          %v2023 = vld [vmem:[#allocation12 + $0x98] sm:$0xf]
          %v2024 = vld [vmem:[#allocation12 + $0x9c] sm:$0xf]
          %v2025 = vld [vmem:[#allocation12 + $0xa0] sm:$0xf]
          %v2026 = vld [vmem:[#allocation12 + $0xa4] sm:$0xf]
          %v2027 = vld [vmem:[#allocation12 + $0xa8] sm:$0xf]
          %v2028 = vld [vmem:[#allocation12 + $0xac] sm:$0xf]
          %v2029 = vld [vmem:[#allocation12 + $0xb0] sm:$0xf]
          %v2030 = vld [vmem:[#allocation12 + $0xb4] sm:$0xf]
          %v2031 = vld [vmem:[#allocation12 + $0xb8] sm:$0xf]
          %v2032 = vld [vmem:[#allocation12 + $0xbc] sm:$0xf]
          %v2033 = vld [vmem:[#allocation12 + $0xc0] sm:$0xf]
          %v2034 = vld [vmem:[#allocation12 + $0xc4] sm:$0xf]
          %v2035 = vld [vmem:[#allocation12 + $0xc8] sm:$0xf]
          %v2036 = vld [vmem:[#allocation12 + $0xcc] sm:$0xf]
          %v2037 = vld [vmem:[#allocation12 + $0xd0] sm:$0xf]
          %v2038 = vld [vmem:[#allocation12 + $0xd4] sm:$0xf]
          %v2039 = vld [vmem:[#allocation12 + $0xd8] sm:$0xf]
          %v2040 = vld [vmem:[#allocation12 + $0xdc] sm:$0xf]
          %v2041 = vld [vmem:[#allocation12 + $0xe0] sm:$0xf]
          %v2042 = vld [vmem:[#allocation12 + $0xe4] sm:$0xf]
          %v2043 = vld [vmem:[#allocation12 + $0xe8] sm:$0xf]
          %v2044 = vld [vmem:[#allocation12 + $0xec] sm:$0xf]
          %v2045 = vld [vmem:[#allocation12 + $0xf0] sm:$0xf]
          %v2046 = vld [vmem:[#allocation12 + $0xf4] sm:$0xf]
          %v2047 = vld [vmem:[#allocation12 + $0xf8] sm:$0xf]
          %v2048 = vld [vmem:[#allocation12 + $0xfc] sm:$0xf]
          %v2049 = vld [vmem:[#allocation14] sm:$0x1]
          %v2051 = vperm.slane %v2049, 0
          %v2117 = vunpack.c.l.b16 %v1985
          %v2118 = vunpack.c.l.b16 %v1986
          %v2119 = vunpack.c.l.b16 %v1987
          %v2120 = vunpack.c.l.b16 %v1988
          %v2121 = vunpack.c.l.b16 %v1989
          %v2122 = vunpack.c.l.b16 %v1990
          %v2123 = vunpack.c.l.b16 %v1991
          %v2124 = vunpack.c.l.b16 %v1992
          %v2125 = vunpack.c.l.b16 %v1993
          %v2126 = vunpack.c.l.b16 %v1994
          %v2127 = vunpack.c.l.b16 %v1995
          %v2128 = vunpack.c.l.b16 %v1996
          %v2129 = vunpack.c.l.b16 %v1997
          %v2130 = vunpack.c.l.b16 %v1998
          %v2131 = vunpack.c.l.b16 %v1999
          %v2132 = vunpack.c.l.b16 %v2000
          %v2133 = vunpack.c.l.b16 %v2001
          %v2134 = vunpack.c.l.b16 %v2002
          %v2135 = vunpack.c.l.b16 %v2003
          %v2136 = vunpack.c.l.b16 %v2004
          %v2137 = vunpack.c.l.b16 %v2005
          %v2138 = vunpack.c.l.b16 %v2006
          %v2139 = vunpack.c.l.b16 %v2007
          %v2140 = vunpack.c.l.b16 %v2008
          %v2141 = vunpack.c.l.b16 %v2009
          %v2142 = vunpack.c.l.b16 %v2010
          %v2143 = vunpack.c.l.b16 %v2011
          %v2144 = vunpack.c.l.b16 %v2012
          %v2145 = vunpack.c.l.b16 %v2013
          %v2146 = vunpack.c.l.b16 %v2014
          %v2147 = vunpack.c.l.b16 %v2015
          %v2148 = vunpack.c.l.b16 %v2016
          %v2149 = vunpack.c.l.b16 %v2017
          %v2150 = vunpack.c.l.b16 %v2018
          %v2151 = vunpack.c.l.b16 %v2019
          %v2152 = vunpack.c.l.b16 %v2020
          %v2153 = vunpack.c.l.b16 %v2021
          %v2154 = vunpack.c.l.b16 %v2022
          %v2155 = vunpack.c.l.b16 %v2023
          %v2156 = vunpack.c.l.b16 %v2024
          %v2157 = vunpack.c.l.b16 %v2025
          %v2158 = vunpack.c.l.b16 %v2026
          %v2159 = vunpack.c.l.b16 %v2027
          %v2160 = vunpack.c.l.b16 %v2028
          %v2161 = vunpack.c.l.b16 %v2029
          %v2162 = vunpack.c.l.b16 %v2030
          %v2163 = vunpack.c.l.b16 %v2031
          %v2164 = vunpack.c.l.b16 %v2032
          %v2165 = vunpack.c.l.b16 %v2033
          %v2166 = vunpack.c.l.b16 %v2034
          %v2167 = vunpack.c.l.b16 %v2035
          %v2168 = vunpack.c.l.b16 %v2036
          %v2169 = vunpack.c.l.b16 %v2037
          %v2170 = vunpack.c.l.b16 %v2038
          %v2171 = vunpack.c.l.b16 %v2039
          %v2172 = vunpack.c.l.b16 %v2040
          %v2173 = vunpack.c.l.b16 %v2041
          %v2174 = vunpack.c.l.b16 %v2042
          %v2175 = vunpack.c.l.b16 %v2043
          %v2176 = vunpack.c.l.b16 %v2044
          %v2177 = vunpack.c.l.b16 %v2045
          %v2178 = vunpack.c.l.b16 %v2046
          %v2179 = vunpack.c.l.b16 %v2047
          %v2180 = vunpack.c.l.b16 %v2048
          %v2181 = vpack.c.b16 %v2118, %v2117
          %v2182 = vpack.c.b16 %v2120, %v2119
          %v2183 = vpack.c.b16 %v2122, %v2121
          %v2184 = vpack.c.b16 %v2124, %v2123
          %v2185 = vpack.c.b16 %v2126, %v2125
          %v2186 = vpack.c.b16 %v2128, %v2127
          %v2187 = vpack.c.b16 %v2130, %v2129
          %v2188 = vpack.c.b16 %v2132, %v2131
          %v2189 = vpack.c.b16 %v2134, %v2133
          %v2190 = vpack.c.b16 %v2136, %v2135
          %v2191 = vpack.c.b16 %v2138, %v2137
          %v2192 = vpack.c.b16 %v2140, %v2139
          %v2193 = vpack.c.b16 %v2142, %v2141
          %v2194 = vpack.c.b16 %v2144, %v2143
          %v2195 = vpack.c.b16 %v2146, %v2145
          %v2196 = vpack.c.b16 %v2148, %v2147
          %v2197 = vpack.c.b16 %v2150, %v2149
          %v2198 = vpack.c.b16 %v2152, %v2151
          %v2199 = vpack.c.b16 %v2154, %v2153
          %v2200 = vpack.c.b16 %v2156, %v2155
          %v2201 = vpack.c.b16 %v2158, %v2157
          %v2202 = vpack.c.b16 %v2160, %v2159
          %v2203 = vpack.c.b16 %v2162, %v2161
          %v2204 = vpack.c.b16 %v2164, %v2163
          %v2205 = vpack.c.b16 %v2166, %v2165
          %v2206 = vpack.c.b16 %v2168, %v2167
          %v2207 = vpack.c.b16 %v2170, %v2169
          %v2208 = vpack.c.b16 %v2172, %v2171
          %v2209 = vpack.c.b16 %v2174, %v2173
          %v2210 = vpack.c.b16 %v2176, %v2175
          %v2211 = vpack.c.b16 %v2178, %v2177
          %v2212 = vpack.c.b16 %v2180, %v2179
          %2245 = vmatpush.bf16.msra.mxu0 %v2188
          %2246 = vmatpush.bf16.msra.mxu0 %v2187
          %2247 = vmatpush.bf16.msra.mxu0 %v2186
          %2248 = vmatpush.bf16.msra.mxu0 %v2185
          %2249 = vmatpush.bf16.msra.mxu0 %v2184
          %2250 = vmatpush.bf16.msra.mxu0 %v2183
          %2251 = vmatpush.bf16.msra.mxu0 %v2182
          %2252 = vmatpush.bf16.msra.mxu0 %v2181
          %2253 = vmatmul.bf16.gmra.mxu0 %v1981
          %v2254 = vpop.f32.mrf.mxu0
          %v2255 = vadd.f32 %v2051, %v2254
          %v2256 = vpop.f32.mrf.mxu0
          %2257 = vdwg.mxu0
          %2258 = vmatpush.bf16.msra.mxu0 %v2196
          %2259 = vmatpush.bf16.msra.mxu0 %v2195
          %2260 = vmatpush.bf16.msra.mxu0 %v2194
          %2261 = vmatpush.bf16.msra.mxu0 %v2193
          %2262 = vmatpush.bf16.msra.mxu0 %v2192
          %2263 = vmatpush.bf16.msra.mxu0 %v2191
          %2264 = vmatpush.bf16.msra.mxu0 %v2190
          %2265 = vmatpush.bf16.msra.mxu0 %v2189
          %2266 = vmatmul.bf16.gmra.mxu0 %v1982
          %v2267 = vpop.f32.mrf.mxu0
          %v2268 = vadd.f32 %v2255, %v2267
          %v2269 = vpop.f32.mrf.mxu0
          %2270 = vdwg.mxu0
          %2271 = vmatpush.bf16.msra.mxu0 %v2204
          %2272 = vmatpush.bf16.msra.mxu0 %v2203
          %2273 = vmatpush.bf16.msra.mxu0 %v2202
          %2274 = vmatpush.bf16.msra.mxu0 %v2201
          %2275 = vmatpush.bf16.msra.mxu0 %v2200
          %2276 = vmatpush.bf16.msra.mxu0 %v2199
          %2277 = vmatpush.bf16.msra.mxu0 %v2198
          %2278 = vmatpush.bf16.msra.mxu0 %v2197
          %2279 = vmatmul.bf16.gmra.mxu0 %v1983
          %v2280 = vpop.f32.mrf.mxu0
          %v2281 = vadd.f32 %v2268, %v2280
          %v2282 = vpop.f32.mrf.mxu0
          %2283 = vdwg.mxu0
          %2284 = vmatpush.bf16.msra.mxu0 %v2212
          %2285 = vmatpush.bf16.msra.mxu0 %v2211
          %2286 = vmatpush.bf16.msra.mxu0 %v2210
          %2287 = vmatpush.bf16.msra.mxu0 %v2209
          %2288 = vmatpush.bf16.msra.mxu0 %v2208
          %2289 = vmatpush.bf16.msra.mxu0 %v2207
          %2290 = vmatpush.bf16.msra.mxu0 %v2206
          %2291 = vmatpush.bf16.msra.mxu0 %v2205
          %2292 = vmatmul.bf16.gmra.mxu0 %v1984
          %v2293 = vpop.f32.mrf.mxu0
          %v2294 = vadd.f32 %v2281, %v2293
          %v2295 = vpop.f32.mrf.mxu0
          %2296 = vdwg.mxu0
          %v2297 = vxor.u32 %v2294, 2147483648
          %v2298 = vmul.f32 %v2297, 1.442695
          %v2299 = vpow.pop %v2298
          %v2300 = vadd.f32 %v2299, 1.0
          %v2301 = vrcp.pop %v2300
          %v2302 = vmul.f32 %v2300, %v2301
          %v2303 = vsub.f32 1.0, %v2302
          %v2304 = vmul.f32 %v2301, %v2303
          %v2305 = vadd.f32 %v2301, %v2304
          %vm2306 = vweird.f32 %v2300
          %vm2307 = vweird.f32 %v2301
          %vm2308 = vmor %vm2306, %vm2307
          %v2309 = vsel %vm2308, %v2301, %v2305
          %v2310 = vand.u32 2147483647, %v2300
          %vm2311 = vcmp.eq.f32.partialorder %v2310, 8.507059e+37
          %v2312 = vand.u32 %v2300, 2147483648
          %v2313 = vor.u32 1.1754944e-38, %v2312
          %v2314 = vsel %vm2311, %v2313, %v2309
          %v2315 = vmul.f32 1.0, %v2314
          %2316 = vst [vmem:[#allocation15] sm:$0xff] %v2315
        $region84: #{tpu_custom_call.1} parent=47 // pred_fallthru
          _
        // Predicated region
        $region85: #{tpu_custom_call.1} parent=47 // pred_check
          %p2317 = pneg %p202
        $region86: #{tpu_custom_call.1} parent=47 // pred_check_branch
          %2319 = sbr.rel (%p2317) target = $region88
        $region87: #{tpu_custom_call.1} parent=47 // pred_region
          %2321 = vsyncadd [#allocation5], 0
          %s2323 = sshll.u32 [#allocation15], 4
          %s2324 = int_to_ptr.vmem [resolvable:$true] %s2323
          %s2325 = sshll.u32 %s7, 4
          %s2326 = int_to_ptr.hbm [resolvable:$true] %s2325
          %2328 = dma.vmem_to_hbm [thread:$0]  %s2324, 128, %s2326, [#allocation5]
        $region88: #{tpu_custom_call.1} parent=47 // pred_fallthru
          _
        // Predicated region
        $region89: #{tpu_custom_call.1} parent=47 // pred_check
          %p2329 = pneg %p202
        $region90: #{tpu_custom_call.1} parent=47 // pred_check_branch
          %2331 = sbr.rel (%p2329) target = $region92
        $region91: #{tpu_custom_call.1} parent=47 // pred_region
          %2333 = dma.done [#allocation5], 128
        $region92: #{tpu_custom_call.1} parent=47 // pred_fallthru
          _
      $region48: #{tpu_custom_call.1} parent=5 // pred_fallthru
        _
      %p2334 = scmp.le.s32.totalorder 2, %s22
      // Predicated region
      $region93: #{tpu_custom_call.1} parent=5 // pred_check
        %p2335 = pneg %p2334
      $region94: #{tpu_custom_call.1} parent=5 // pred_check_branch
        %2337 = sbr.rel (%p2335) target = $region96
      $region95: #{tpu_custom_call.1} parent=5 // pred_region
        %s2338 = ssub.s32 %s22, 2
      $region96: #{tpu_custom_call.1} parent=5 // pred_fallthru
        _
    $region6: #{tpu_custom_call.1} parent=1 // loop_footer
      %s26 = sadd.s32 1, %s22
    $region7: #{tpu_custom_call.1} parent=1 // loop_footer_branch
      %21 = sbr.rel target = $region3
    $region8: #{tpu_custom_call.1} parent=1 // loop_exit
      _
    %2339 = vsyncpa [#allocation4], 1
    %s2340 = scalar_lea.sflag [#allocation4], 1
    %2341 = vsyncpa %s2340, 1
    %2342 = vsyncpa [#allocation7], 1
    %s2343 = scalar_lea.sflag [#allocation7], 1
    %2344 = vsyncpa %s2343, 1
    %2345 = vsyncpa [#allocation10], 1
    %s2346 = scalar_lea.sflag [#allocation10], 1
    %2347 = vsyncpa %s2346, 1
    %2348 = vsyncpa [#allocation13], 1
    %2349 = vsyncpa [#allocation5], 1
    %s2350 = scalar_lea.sflag [#allocation5], 1
    %2351 = vsyncpa %s2350, 1

</llo_original>
